<compile_context>
chip_gen: v7x
topology: tpu7x:2x2x1
jax: 0.10.0
libtpu: 0.0.40
codegen_flags: <defaults>
</compile_context>

<pallas_src>
import functools
import math

import jax
import jax.numpy as jnp
from jax.experimental import pallas as pl
from jax.experimental.pallas import tpu as pltpu

_LANES = 128


def _gelu_exact(x):
    # PyTorch nn.GELU() default = exact (erf-based) GELU.
    return 0.5 * x * (1.0 + jax.lax.erf(x * (1.0 / math.sqrt(2.0))))


def _conv_ffn_kernel(x_ref, w1_ref, w2_ref, o_ref, *, cin, cint, cout):
    # x_ref : (1, Cin,  S_BLK, 128)  VMEM, per-channel dense (S_BLK, 128) slabs
    # w1_ref: (Cint, Cin)            SMEM  (PyTorch (out, in), 1x1 dims dropped)
    # w2_ref: (Cout, Cint)           SMEM
    # o_ref : (1, Cout, S_BLK, 128)  VMEM
    #
    # Fully fused per-pixel MLP: out[o] = gelu(sum_m w2[o,m]*gelu(sum_c w1[m,c]*x[c])) + x[o]
    # All FMAs on the VPU with SMEM-scalar broadcasts; f32 math throughout.
    xs = [x_ref[0, c].astype(jnp.float32) for c in range(cin)]
    accs = [None] * cout
    for m in range(cint):
        h = xs[0] * w1_ref[m, 0]
        for c in range(1, cin):
            h = h + xs[c] * w1_ref[m, c]
        h = _gelu_exact(h)
        for o in range(cout):
            t = h * w2_ref[o, m]
            accs[o] = t if accs[o] is None else accs[o] + t
    for o in range(cout):
        y = _gelu_exact(accs[o]) + xs[o]          # residual add
        o_ref[0, o] = y.astype(o_ref.dtype)


def conv_ffn_forward(x_nchw, w1, w2, *, vmem_block_budget_bytes=12 * 1024 * 1024):
    """x_nchw: (N, Cin, H, W). w1: (Cint, Cin). w2: (Cout, Cint).
    Returns (N, Cout, H, W). Requires Cout == Cin (residual add)."""
    N, Cin, H, W = x_nchw.shape
    Cint, Cin_w = w1.shape
    Cout, Cint_w = w2.shape
    assert Cin_w == Cin and Cint_w == Cint, "weight shapes inconsistent with input"
    assert Cout == Cin, "residual add requires out_channels == in_channels"
    # Small-channel VPU/SMEM path only (see TODO at top of file).
    assert Cin <= 64 and Cint <= 512, "small-channel VPU path only"

    HW = H * W
    s_rows = pl.cdiv(HW, _LANES)
    hw_pad = s_rows * _LANES

    x_rows = x_nchw.reshape(N, Cin, HW)           # contiguous reshape: free
    if hw_pad != HW:
        # Off the fast path: only pads the trailing <128 lanes of each channel row.
        x_rows = jnp.pad(x_rows, ((0, 0), (0, 0), (0, hw_pad - HW)))
    # Fold spatial onto (sublane, lane): every channel is a dense (s_rows, 128) slab.
    x_fold = x_rows.reshape(N, Cin, s_rows, _LANES)

    # Spatial block size: as large as a ~12 MiB per-step VMEM budget allows
    # (double-buffered x/out blocks + f32 compute slabs), so each grid step moves
    # multiple MiB of HBM traffic and the fixed per-step overhead is amortized.
    itemsize = jnp.dtype(x_nchw.dtype).itemsize
    per_srow = (2 * (Cin + Cout) * itemsize + (Cin + Cout + 2) * 4) * _LANES
    s_blk = min(s_rows, max(8, vmem_block_budget_bytes // per_srow))
    if s_blk < s_rows:
        s_blk = max(8, (s_blk // 16) * 16)        # keep (8/16, 128) tiling happy
    if N == 1 and s_blk == s_rows and s_rows >= 16:
        s_blk = max(8, ((s_rows // 2) // 8) * 8)  # keep >=2 parallel steps (v7x: 2 TCs)
    n_sblk = pl.cdiv(s_rows, s_blk)               # partial last block masked by Pallas

    kernel = functools.partial(_conv_ffn_kernel, cin=Cin, cint=Cint, cout=Cout)

    out_fold = pl.pallas_call(
        kernel,
        out_shape=jax.ShapeDtypeStruct((N, Cout, s_rows, _LANES), x_nchw.dtype),
        grid_spec=pltpu.PrefetchScalarGridSpec(
            num_scalar_prefetch=0,
            grid=(N, n_sblk),
            in_specs=[
                pl.BlockSpec((1, Cin, s_blk, _LANES), lambda n, s: (n, 0, s, 0)),
                pl.BlockSpec(memory_space=pltpu.MemorySpace.SMEM),   # w1 scalars
                pl.BlockSpec(memory_space=pltpu.MemorySpace.SMEM),   # w2 scalars
            ],
            out_specs=pl.BlockSpec((1, Cout, s_blk, _LANES),
                                   lambda n, s: (n, 0, s, 0)),
        ),
        compiler_params=pltpu.CompilerParams(
            dimension_semantics=("parallel", "parallel"),
            vmem_limit_bytes=32 * 1024 * 1024),
    )(x_fold, w1.astype(jnp.float32), w2.astype(jnp.float32))

    out = out_fold.reshape(N, Cout, hw_pad)
    if hw_pad != HW:
        out = out[:, :, :HW]
    return out.reshape(N, Cout, H, W)             # free reshape back to NCHW


def conv_ffn_reference(x_nchw, w1, w2):
    """Pure-JAX reference matching the PyTorch forward (NCHW, f32 math)."""
    hi = jax.lax.Precision.HIGHEST
    h = _gelu_exact(jnp.einsum("oc,nchw->nohw", w1, x_nchw, precision=hi))
    y = _gelu_exact(jnp.einsum("oc,nchw->nohw", w2, h, precision=hi))
    return y + x_nchw


if __name__ == "__main__":
    key = jax.random.PRNGKey(0)
    k_x, k_w1, k_w2 = jax.random.split(key, 3)

    # Shapes consistent with ConvFFN(4, 4, expend_ratio=4)
    N, Cin, H, W = 2, 4, 16, 16
    expend_ratio = 4
    Cint = Cin * expend_ratio
    Cout = Cin

    x = jax.random.normal(k_x, (N, Cin, H, W), dtype=jnp.float32)
    # PyTorch conv weight is (out, in, 1, 1); trailing 1x1 dims dropped.
    w1 = jax.random.normal(k_w1, (Cint, Cin), dtype=jnp.float32) / math.sqrt(Cin)
    w2 = jax.random.normal(k_w2, (Cout, Cint), dtype=jnp.float32) / math.sqrt(Cint)

    out = conv_ffn_forward(x, w1, w2)
    out = jax.block_until_ready(out)

    ref = conv_ffn_reference(x, w1, w2)
    assert out.shape == (N, Cout, H, W)
    assert jnp.allclose(out, ref, atol=2e-5, rtol=2e-5), "mismatch vs reference"

    print("KERNEL_OK")
</pallas_src>

<mosaic_0001>
module attributes {stable_mosaic.version = 11 : i64} {
  func.func @_conv_ffn_kernel(%arg0: i32, %arg1: i32, %arg2: memref<1x4x2x128xf32, #tpu.memory_space<vmem>>, %arg3: memref<16x4xf32, #tpu.memory_space<smem>>, %arg4: memref<4x16xf32, #tpu.memory_space<smem>>, %arg5: memref<1x4x2x128xf32, #tpu.memory_space<vmem>>) attributes {dimension_semantics = [#tpu.dimension_semantics<parallel>, #tpu.dimension_semantics<parallel>], iteration_bounds = array<i64: 2, 1>, scalar_prefetch = 0 : i64, scratch_operands = 0 : i64, tpu.core_type = #tpu.core_type<tc>, window_params = [{transform_indices = @transform_0, window_bounds = array<i64: 1, 4, 2, 128>}, {transform_indices = @transform_1, window_bounds = array<i64: 16, 4>}, {transform_indices = @transform_2, window_bounds = array<i64: 4, 16>}, {transform_indices = @transform_3, window_bounds = array<i64: 1, 4, 2, 128>}]} {
    %c0 = arith.constant 0 : index
    %c0_0 = arith.constant 0 : index
    %c0_1 = arith.constant 0 : index
    %c0_2 = arith.constant 0 : index
    %0 = vector.load %arg2[%c0, %c0_0, %c0_1, %c0_2] : memref<1x4x2x128xf32, #tpu.memory_space<vmem>>, vector<1x1x2x128xf32>
    %1 = vector.shape_cast %0 : vector<1x1x2x128xf32> to vector<2x128xf32>
    %c0_3 = arith.constant 0 : index
    %c1 = arith.constant 1 : index
    %c0_4 = arith.constant 0 : index
    %c0_5 = arith.constant 0 : index
    %2 = vector.load %arg2[%c0_3, %c1, %c0_4, %c0_5] : memref<1x4x2x128xf32, #tpu.memory_space<vmem>>, vector<1x1x2x128xf32>
    %3 = vector.shape_cast %2 : vector<1x1x2x128xf32> to vector<2x128xf32>
    %c0_6 = arith.constant 0 : index
    %c2 = arith.constant 2 : index
    %c0_7 = arith.constant 0 : index
    %c0_8 = arith.constant 0 : index
    %4 = vector.load %arg2[%c0_6, %c2, %c0_7, %c0_8] : memref<1x4x2x128xf32, #tpu.memory_space<vmem>>, vector<1x1x2x128xf32>
    %5 = vector.shape_cast %4 : vector<1x1x2x128xf32> to vector<2x128xf32>
    %c0_9 = arith.constant 0 : index
    %c3 = arith.constant 3 : index
    %c0_10 = arith.constant 0 : index
    %c0_11 = arith.constant 0 : index
    %6 = vector.load %arg2[%c0_9, %c3, %c0_10, %c0_11] : memref<1x4x2x128xf32, #tpu.memory_space<vmem>>, vector<1x1x2x128xf32>
    %7 = vector.shape_cast %6 : vector<1x1x2x128xf32> to vector<2x128xf32>
    %c0_12 = arith.constant 0 : index
    %c0_13 = arith.constant 0 : index
    %8 = memref.load %arg3[%c0_12, %c0_13] : memref<16x4xf32, #tpu.memory_space<smem>>
    %9 = vector.broadcast %8 : f32 to vector<2x128xf32>
    %10 = arith.mulf %1, %9 : vector<2x128xf32>
    %c0_14 = arith.constant 0 : index
    %c1_15 = arith.constant 1 : index
    %11 = memref.load %arg3[%c0_14, %c1_15] : memref<16x4xf32, #tpu.memory_space<smem>>
    %12 = vector.broadcast %11 : f32 to vector<2x128xf32>
    %13 = arith.mulf %3, %12 : vector<2x128xf32>
    %14 = arith.addf %10, %13 : vector<2x128xf32>
    %c0_16 = arith.constant 0 : index
    %c2_17 = arith.constant 2 : index
    %15 = memref.load %arg3[%c0_16, %c2_17] : memref<16x4xf32, #tpu.memory_space<smem>>
    %16 = vector.broadcast %15 : f32 to vector<2x128xf32>
    %17 = arith.mulf %5, %16 : vector<2x128xf32>
    %18 = arith.addf %14, %17 : vector<2x128xf32>
    %c0_18 = arith.constant 0 : index
    %c3_19 = arith.constant 3 : index
    %19 = memref.load %arg3[%c0_18, %c3_19] : memref<16x4xf32, #tpu.memory_space<smem>>
    %20 = vector.broadcast %19 : f32 to vector<2x128xf32>
    %21 = arith.mulf %7, %20 : vector<2x128xf32>
    %22 = arith.addf %18, %21 : vector<2x128xf32>
    %cst = arith.constant 5.000000e-01 : f32
    %23 = vector.broadcast %cst : f32 to vector<2x128xf32>
    %24 = arith.mulf %23, %22 : vector<2x128xf32>
    %cst_20 = arith.constant 0.707106769 : f32
    %25 = vector.broadcast %cst_20 : f32 to vector<2x128xf32>
    %26 = arith.mulf %22, %25 : vector<2x128xf32>
    %27 = math.erf %26 : vector<2x128xf32>
    %cst_21 = arith.constant 1.000000e+00 : f32
    %28 = vector.broadcast %cst_21 : f32 to vector<2x128xf32>
    %29 = arith.addf %28, %27 : vector<2x128xf32>
    %30 = arith.mulf %24, %29 : vector<2x128xf32>
    %c0_22 = arith.constant 0 : index
    %c0_23 = arith.constant 0 : index
    %31 = memref.load %arg4[%c0_22, %c0_23] : memref<4x16xf32, #tpu.memory_space<smem>>
    %32 = vector.broadcast %31 : f32 to vector<2x128xf32>
    %33 = arith.mulf %30, %32 : vector<2x128xf32>
    %c1_24 = arith.constant 1 : index
    %c0_25 = arith.constant 0 : index
    %34 = memref.load %arg4[%c1_24, %c0_25] : memref<4x16xf32, #tpu.memory_space<smem>>
    %35 = vector.broadcast %34 : f32 to vector<2x128xf32>
    %36 = arith.mulf %30, %35 : vector<2x128xf32>
    %c2_26 = arith.constant 2 : index
    %c0_27 = arith.constant 0 : index
    %37 = memref.load %arg4[%c2_26, %c0_27] : memref<4x16xf32, #tpu.memory_space<smem>>
    %38 = vector.broadcast %37 : f32 to vector<2x128xf32>
    %39 = arith.mulf %30, %38 : vector<2x128xf32>
    %c3_28 = arith.constant 3 : index
    %c0_29 = arith.constant 0 : index
    %40 = memref.load %arg4[%c3_28, %c0_29] : memref<4x16xf32, #tpu.memory_space<smem>>
    %41 = vector.broadcast %40 : f32 to vector<2x128xf32>
    %42 = arith.mulf %30, %41 : vector<2x128xf32>
    %c1_30 = arith.constant 1 : index
    %c0_31 = arith.constant 0 : index
    %43 = memref.load %arg3[%c1_30, %c0_31] : memref<16x4xf32, #tpu.memory_space<smem>>
    %44 = vector.broadcast %43 : f32 to vector<2x128xf32>
    %45 = arith.mulf %1, %44 : vector<2x128xf32>
    %c1_32 = arith.constant 1 : index
    %c1_33 = arith.constant 1 : index
    %46 = memref.load %arg3[%c1_32, %c1_33] : memref<16x4xf32, #tpu.memory_space<smem>>
    %47 = vector.broadcast %46 : f32 to vector<2x128xf32>
    %48 = arith.mulf %3, %47 : vector<2x128xf32>
    %49 = arith.addf %45, %48 : vector<2x128xf32>
    %c1_34 = arith.constant 1 : index
    %c2_35 = arith.constant 2 : index
    %50 = memref.load %arg3[%c1_34, %c2_35] : memref<16x4xf32, #tpu.memory_space<smem>>
    %51 = vector.broadcast %50 : f32 to vector<2x128xf32>
    %52 = arith.mulf %5, %51 : vector<2x128xf32>
    %53 = arith.addf %49, %52 : vector<2x128xf32>
    %c1_36 = arith.constant 1 : index
    %c3_37 = arith.constant 3 : index
    %54 = memref.load %arg3[%c1_36, %c3_37] : memref<16x4xf32, #tpu.memory_space<smem>>
    %55 = vector.broadcast %54 : f32 to vector<2x128xf32>
    %56 = arith.mulf %7, %55 : vector<2x128xf32>
    %57 = arith.addf %53, %56 : vector<2x128xf32>
    %cst_38 = arith.constant 5.000000e-01 : f32
    %58 = vector.broadcast %cst_38 : f32 to vector<2x128xf32>
    %59 = arith.mulf %58, %57 : vector<2x128xf32>
    %cst_39 = arith.constant 0.707106769 : f32
    %60 = vector.broadcast %cst_39 : f32 to vector<2x128xf32>
    %61 = arith.mulf %57, %60 : vector<2x128xf32>
    %62 = math.erf %61 : vector<2x128xf32>
    %cst_40 = arith.constant 1.000000e+00 : f32
    %63 = vector.broadcast %cst_40 : f32 to vector<2x128xf32>
    %64 = arith.addf %63, %62 : vector<2x128xf32>
    %65 = arith.mulf %59, %64 : vector<2x128xf32>
    %c0_41 = arith.constant 0 : index
    %c1_42 = arith.constant 1 : index
    %66 = memref.load %arg4[%c0_41, %c1_42] : memref<4x16xf32, #tpu.memory_space<smem>>
    %67 = vector.broadcast %66 : f32 to vector<2x128xf32>
    %68 = arith.mulf %65, %67 : vector<2x128xf32>
    %69 = arith.addf %33, %68 : vector<2x128xf32>
    %c1_43 = arith.constant 1 : index
    %c1_44 = arith.constant 1 : index
    %70 = memref.load %arg4[%c1_43, %c1_44] : memref<4x16xf32, #tpu.memory_space<smem>>
    %71 = vector.broadcast %70 : f32 to vector<2x128xf32>
    %72 = arith.mulf %65, %71 : vector<2x128xf32>
    %73 = arith.addf %36, %72 : vector<2x128xf32>
    %c2_45 = arith.constant 2 : index
    %c1_46 = arith.constant 1 : index
    %74 = memref.load %arg4[%c2_45, %c1_46] : memref<4x16xf32, #tpu.memory_space<smem>>
    %75 = vector.broadcast %74 : f32 to vector<2x128xf32>
    %76 = arith.mulf %65, %75 : vector<2x128xf32>
    %77 = arith.addf %39, %76 : vector<2x128xf32>
    %c3_47 = arith.constant 3 : index
    %c1_48 = arith.constant 1 : index
    %78 = memref.load %arg4[%c3_47, %c1_48] : memref<4x16xf32, #tpu.memory_space<smem>>
    %79 = vector.broadcast %78 : f32 to vector<2x128xf32>
    %80 = arith.mulf %65, %79 : vector<2x128xf32>
    %81 = arith.addf %42, %80 : vector<2x128xf32>
    %c2_49 = arith.constant 2 : index
    %c0_50 = arith.constant 0 : index
    %82 = memref.load %arg3[%c2_49, %c0_50] : memref<16x4xf32, #tpu.memory_space<smem>>
    %83 = vector.broadcast %82 : f32 to vector<2x128xf32>
    %84 = arith.mulf %1, %83 : vector<2x128xf32>
    %c2_51 = arith.constant 2 : index
    %c1_52 = arith.constant 1 : index
    %85 = memref.load %arg3[%c2_51, %c1_52] : memref<16x4xf32, #tpu.memory_space<smem>>
    %86 = vector.broadcast %85 : f32 to vector<2x128xf32>
    %87 = arith.mulf %3, %86 : vector<2x128xf32>
    %88 = arith.addf %84, %87 : vector<2x128xf32>
    %c2_53 = arith.constant 2 : index
    %c2_54 = arith.constant 2 : index
    %89 = memref.load %arg3[%c2_53, %c2_54] : memref<16x4xf32, #tpu.memory_space<smem>>
    %90 = vector.broadcast %89 : f32 to vector<2x128xf32>
    %91 = arith.mulf %5, %90 : vector<2x128xf32>
    %92 = arith.addf %88, %91 : vector<2x128xf32>
    %c2_55 = arith.constant 2 : index
    %c3_56 = arith.constant 3 : index
    %93 = memref.load %arg3[%c2_55, %c3_56] : memref<16x4xf32, #tpu.memory_space<smem>>
    %94 = vector.broadcast %93 : f32 to vector<2x128xf32>
    %95 = arith.mulf %7, %94 : vector<2x128xf32>
    %96 = arith.addf %92, %95 : vector<2x128xf32>
    %cst_57 = arith.constant 5.000000e-01 : f32
    %97 = vector.broadcast %cst_57 : f32 to vector<2x128xf32>
    %98 = arith.mulf %97, %96 : vector<2x128xf32>
    %cst_58 = arith.constant 0.707106769 : f32
    %99 = vector.broadcast %cst_58 : f32 to vector<2x128xf32>
    %100 = arith.mulf %96, %99 : vector<2x128xf32>
    %101 = math.erf %100 : vector<2x128xf32>
    %cst_59 = arith.constant 1.000000e+00 : f32
    %102 = vector.broadcast %cst_59 : f32 to vector<2x128xf32>
    %103 = arith.addf %102, %101 : vector<2x128xf32>
    %104 = arith.mulf %98, %103 : vector<2x128xf32>
    %c0_60 = arith.constant 0 : index
    %c2_61 = arith.constant 2 : index
    %105 = memref.load %arg4[%c0_60, %c2_61] : memref<4x16xf32, #tpu.memory_space<smem>>
    %106 = vector.broadcast %105 : f32 to vector<2x128xf32>
    %107 = arith.mulf %104, %106 : vector<2x128xf32>
    %108 = arith.addf %69, %107 : vector<2x128xf32>
    %c1_62 = arith.constant 1 : index
    %c2_63 = arith.constant 2 : index
    %109 = memref.load %arg4[%c1_62, %c2_63] : memref<4x16xf32, #tpu.memory_space<smem>>
    %110 = vector.broadcast %109 : f32 to vector<2x128xf32>
    %111 = arith.mulf %104, %110 : vector<2x128xf32>
    %112 = arith.addf %73, %111 : vector<2x128xf32>
    %c2_64 = arith.constant 2 : index
    %c2_65 = arith.constant 2 : index
    %113 = memref.load %arg4[%c2_64, %c2_65] : memref<4x16xf32, #tpu.memory_space<smem>>
    %114 = vector.broadcast %113 : f32 to vector<2x128xf32>
    %115 = arith.mulf %104, %114 : vector<2x128xf32>
    %116 = arith.addf %77, %115 : vector<2x128xf32>
    %c3_66 = arith.constant 3 : index
    %c2_67 = arith.constant 2 : index
    %117 = memref.load %arg4[%c3_66, %c2_67] : memref<4x16xf32, #tpu.memory_space<smem>>
    %118 = vector.broadcast %117 : f32 to vector<2x128xf32>
    %119 = arith.mulf %104, %118 : vector<2x128xf32>
    %120 = arith.addf %81, %119 : vector<2x128xf32>
    %c3_68 = arith.constant 3 : index
    %c0_69 = arith.constant 0 : index
    %121 = memref.load %arg3[%c3_68, %c0_69] : memref<16x4xf32, #tpu.memory_space<smem>>
    %122 = vector.broadcast %121 : f32 to vector<2x128xf32>
    %123 = arith.mulf %1, %122 : vector<2x128xf32>
    %c3_70 = arith.constant 3 : index
    %c1_71 = arith.constant 1 : index
    %124 = memref.load %arg3[%c3_70, %c1_71] : memref<16x4xf32, #tpu.memory_space<smem>>
    %125 = vector.broadcast %124 : f32 to vector<2x128xf32>
    %126 = arith.mulf %3, %125 : vector<2x128xf32>
    %127 = arith.addf %123, %126 : vector<2x128xf32>
    %c3_72 = arith.constant 3 : index
    %c2_73 = arith.constant 2 : index
    %128 = memref.load %arg3[%c3_72, %c2_73] : memref<16x4xf32, #tpu.memory_space<smem>>
    %129 = vector.broadcast %128 : f32 to vector<2x128xf32>
    %130 = arith.mulf %5, %129 : vector<2x128xf32>
    %131 = arith.addf %127, %130 : vector<2x128xf32>
    %c3_74 = arith.constant 3 : index
    %c3_75 = arith.constant 3 : index
    %132 = memref.load %arg3[%c3_74, %c3_75] : memref<16x4xf32, #tpu.memory_space<smem>>
    %133 = vector.broadcast %132 : f32 to vector<2x128xf32>
    %134 = arith.mulf %7, %133 : vector<2x128xf32>
    %135 = arith.addf %131, %134 : vector<2x128xf32>
    %cst_76 = arith.constant 5.000000e-01 : f32
    %136 = vector.broadcast %cst_76 : f32 to vector<2x128xf32>
    %137 = arith.mulf %136, %135 : vector<2x128xf32>
    %cst_77 = arith.constant 0.707106769 : f32
    %138 = vector.broadcast %cst_77 : f32 to vector<2x128xf32>
    %139 = arith.mulf %135, %138 : vector<2x128xf32>
    %140 = math.erf %139 : vector<2x128xf32>
    %cst_78 = arith.constant 1.000000e+00 : f32
    %141 = vector.broadcast %cst_78 : f32 to vector<2x128xf32>
    %142 = arith.addf %141, %140 : vector<2x128xf32>
    %143 = arith.mulf %137, %142 : vector<2x128xf32>
    %c0_79 = arith.constant 0 : index
    %c3_80 = arith.constant 3 : index
    %144 = memref.load %arg4[%c0_79, %c3_80] : memref<4x16xf32, #tpu.memory_space<smem>>
    %145 = vector.broadcast %144 : f32 to vector<2x128xf32>
    %146 = arith.mulf %143, %145 : vector<2x128xf32>
    %147 = arith.addf %108, %146 : vector<2x128xf32>
    %c1_81 = arith.constant 1 : index
    %c3_82 = arith.constant 3 : index
    %148 = memref.load %arg4[%c1_81, %c3_82] : memref<4x16xf32, #tpu.memory_space<smem>>
    %149 = vector.broadcast %148 : f32 to vector<2x128xf32>
    %150 = arith.mulf %143, %149 : vector<2x128xf32>
    %151 = arith.addf %112, %150 : vector<2x128xf32>
    %c2_83 = arith.constant 2 : index
    %c3_84 = arith.constant 3 : index
    %152 = memref.load %arg4[%c2_83, %c3_84] : memref<4x16xf32, #tpu.memory_space<smem>>
    %153 = vector.broadcast %152 : f32 to vector<2x128xf32>
    %154 = arith.mulf %143, %153 : vector<2x128xf32>
    %155 = arith.addf %116, %154 : vector<2x128xf32>
    %c3_85 = arith.constant 3 : index
    %c3_86 = arith.constant 3 : index
    %156 = memref.load %arg4[%c3_85, %c3_86] : memref<4x16xf32, #tpu.memory_space<smem>>
    %157 = vector.broadcast %156 : f32 to vector<2x128xf32>
    %158 = arith.mulf %143, %157 : vector<2x128xf32>
    %159 = arith.addf %120, %158 : vector<2x128xf32>
    %c4 = arith.constant 4 : index
    %c0_87 = arith.constant 0 : index
    %160 = memref.load %arg3[%c4, %c0_87] : memref<16x4xf32, #tpu.memory_space<smem>>
    %161 = vector.broadcast %160 : f32 to vector<2x128xf32>
    %162 = arith.mulf %1, %161 : vector<2x128xf32>
    %c4_88 = arith.constant 4 : index
    %c1_89 = arith.constant 1 : index
    %163 = memref.load %arg3[%c4_88, %c1_89] : memref<16x4xf32, #tpu.memory_space<smem>>
    %164 = vector.broadcast %163 : f32 to vector<2x128xf32>
    %165 = arith.mulf %3, %164 : vector<2x128xf32>
    %166 = arith.addf %162, %165 : vector<2x128xf32>
    %c4_90 = arith.constant 4 : index
    %c2_91 = arith.constant 2 : index
    %167 = memref.load %arg3[%c4_90, %c2_91] : memref<16x4xf32, #tpu.memory_space<smem>>
    %168 = vector.broadcast %167 : f32 to vector<2x128xf32>
    %169 = arith.mulf %5, %168 : vector<2x128xf32>
    %170 = arith.addf %166, %169 : vector<2x128xf32>
    %c4_92 = arith.constant 4 : index
    %c3_93 = arith.constant 3 : index
    %171 = memref.load %arg3[%c4_92, %c3_93] : memref<16x4xf32, #tpu.memory_space<smem>>
    %172 = vector.broadcast %171 : f32 to vector<2x128xf32>
    %173 = arith.mulf %7, %172 : vector<2x128xf32>
    %174 = arith.addf %170, %173 : vector<2x128xf32>
    %cst_94 = arith.constant 5.000000e-01 : f32
    %175 = vector.broadcast %cst_94 : f32 to vector<2x128xf32>
    %176 = arith.mulf %175, %174 : vector<2x128xf32>
    %cst_95 = arith.constant 0.707106769 : f32
    %177 = vector.broadcast %cst_95 : f32 to vector<2x128xf32>
    %178 = arith.mulf %174, %177 : vector<2x128xf32>
    %179 = math.erf %178 : vector<2x128xf32>
    %cst_96 = arith.constant 1.000000e+00 : f32
    %180 = vector.broadcast %cst_96 : f32 to vector<2x128xf32>
    %181 = arith.addf %180, %179 : vector<2x128xf32>
    %182 = arith.mulf %176, %181 : vector<2x128xf32>
    %c0_97 = arith.constant 0 : index
    %c4_98 = arith.constant 4 : index
    %183 = memref.load %arg4[%c0_97, %c4_98] : memref<4x16xf32, #tpu.memory_space<smem>>
    %184 = vector.broadcast %183 : f32 to vector<2x128xf32>
    %185 = arith.mulf %182, %184 : vector<2x128xf32>
    %186 = arith.addf %147, %185 : vector<2x128xf32>
    %c1_99 = arith.constant 1 : index
    %c4_100 = arith.constant 4 : index
    %187 = memref.load %arg4[%c1_99, %c4_100] : memref<4x16xf32, #tpu.memory_space<smem>>
    %188 = vector.broadcast %187 : f32 to vector<2x128xf32>
    %189 = arith.mulf %182, %188 : vector<2x128xf32>
    %190 = arith.addf %151, %189 : vector<2x128xf32>
    %c2_101 = arith.constant 2 : index
    %c4_102 = arith.constant 4 : index
    %191 = memref.load %arg4[%c2_101, %c4_102] : memref<4x16xf32, #tpu.memory_space<smem>>
    %192 = vector.broadcast %191 : f32 to vector<2x128xf32>
    %193 = arith.mulf %182, %192 : vector<2x128xf32>
    %194 = arith.addf %155, %193 : vector<2x128xf32>
    %c3_103 = arith.constant 3 : index
    %c4_104 = arith.constant 4 : index
    %195 = memref.load %arg4[%c3_103, %c4_104] : memref<4x16xf32, #tpu.memory_space<smem>>
    %196 = vector.broadcast %195 : f32 to vector<2x128xf32>
    %197 = arith.mulf %182, %196 : vector<2x128xf32>
    %198 = arith.addf %159, %197 : vector<2x128xf32>
    %c5 = arith.constant 5 : index
    %c0_105 = arith.constant 0 : index
    %199 = memref.load %arg3[%c5, %c0_105] : memref<16x4xf32, #tpu.memory_space<smem>>
    %200 = vector.broadcast %199 : f32 to vector<2x128xf32>
    %201 = arith.mulf %1, %200 : vector<2x128xf32>
    %c5_106 = arith.constant 5 : index
    %c1_107 = arith.constant 1 : index
    %202 = memref.load %arg3[%c5_106, %c1_107] : memref<16x4xf32, #tpu.memory_space<smem>>
    %203 = vector.broadcast %202 : f32 to vector<2x128xf32>
    %204 = arith.mulf %3, %203 : vector<2x128xf32>
    %205 = arith.addf %201, %204 : vector<2x128xf32>
    %c5_108 = arith.constant 5 : index
    %c2_109 = arith.constant 2 : index
    %206 = memref.load %arg3[%c5_108, %c2_109] : memref<16x4xf32, #tpu.memory_space<smem>>
    %207 = vector.broadcast %206 : f32 to vector<2x128xf32>
    %208 = arith.mulf %5, %207 : vector<2x128xf32>
    %209 = arith.addf %205, %208 : vector<2x128xf32>
    %c5_110 = arith.constant 5 : index
    %c3_111 = arith.constant 3 : index
    %210 = memref.load %arg3[%c5_110, %c3_111] : memref<16x4xf32, #tpu.memory_space<smem>>
    %211 = vector.broadcast %210 : f32 to vector<2x128xf32>
    %212 = arith.mulf %7, %211 : vector<2x128xf32>
    %213 = arith.addf %209, %212 : vector<2x128xf32>
    %cst_112 = arith.constant 5.000000e-01 : f32
    %214 = vector.broadcast %cst_112 : f32 to vector<2x128xf32>
    %215 = arith.mulf %214, %213 : vector<2x128xf32>
    %cst_113 = arith.constant 0.707106769 : f32
    %216 = vector.broadcast %cst_113 : f32 to vector<2x128xf32>
    %217 = arith.mulf %213, %216 : vector<2x128xf32>
    %218 = math.erf %217 : vector<2x128xf32>
    %cst_114 = arith.constant 1.000000e+00 : f32
    %219 = vector.broadcast %cst_114 : f32 to vector<2x128xf32>
    %220 = arith.addf %219, %218 : vector<2x128xf32>
    %221 = arith.mulf %215, %220 : vector<2x128xf32>
    %c0_115 = arith.constant 0 : index
    %c5_116 = arith.constant 5 : index
    %222 = memref.load %arg4[%c0_115, %c5_116] : memref<4x16xf32, #tpu.memory_space<smem>>
    %223 = vector.broadcast %222 : f32 to vector<2x128xf32>
    %224 = arith.mulf %221, %223 : vector<2x128xf32>
    %225 = arith.addf %186, %224 : vector<2x128xf32>
    %c1_117 = arith.constant 1 : index
    %c5_118 = arith.constant 5 : index
    %226 = memref.load %arg4[%c1_117, %c5_118] : memref<4x16xf32, #tpu.memory_space<smem>>
    %227 = vector.broadcast %226 : f32 to vector<2x128xf32>
    %228 = arith.mulf %221, %227 : vector<2x128xf32>
    %229 = arith.addf %190, %228 : vector<2x128xf32>
    %c2_119 = arith.constant 2 : index
    %c5_120 = arith.constant 5 : index
    %230 = memref.load %arg4[%c2_119, %c5_120] : memref<4x16xf32, #tpu.memory_space<smem>>
    %231 = vector.broadcast %230 : f32 to vector<2x128xf32>
    %232 = arith.mulf %221, %231 : vector<2x128xf32>
    %233 = arith.addf %194, %232 : vector<2x128xf32>
    %c3_121 = arith.constant 3 : index
    %c5_122 = arith.constant 5 : index
    %234 = memref.load %arg4[%c3_121, %c5_122] : memref<4x16xf32, #tpu.memory_space<smem>>
    %235 = vector.broadcast %234 : f32 to vector<2x128xf32>
    %236 = arith.mulf %221, %235 : vector<2x128xf32>
    %237 = arith.addf %198, %236 : vector<2x128xf32>
    %c6 = arith.constant 6 : index
    %c0_123 = arith.constant 0 : index
    %238 = memref.load %arg3[%c6, %c0_123] : memref<16x4xf32, #tpu.memory_space<smem>>
    %239 = vector.broadcast %238 : f32 to vector<2x128xf32>
    %240 = arith.mulf %1, %239 : vector<2x128xf32>
    %c6_124 = arith.constant 6 : index
    %c1_125 = arith.constant 1 : index
    %241 = memref.load %arg3[%c6_124, %c1_125] : memref<16x4xf32, #tpu.memory_space<smem>>
    %242 = vector.broadcast %241 : f32 to vector<2x128xf32>
    %243 = arith.mulf %3, %242 : vector<2x128xf32>
    %244 = arith.addf %240, %243 : vector<2x128xf32>
    %c6_126 = arith.constant 6 : index
    %c2_127 = arith.constant 2 : index
    %245 = memref.load %arg3[%c6_126, %c2_127] : memref<16x4xf32, #tpu.memory_space<smem>>
    %246 = vector.broadcast %245 : f32 to vector<2x128xf32>
    %247 = arith.mulf %5, %246 : vector<2x128xf32>
    %248 = arith.addf %244, %247 : vector<2x128xf32>
    %c6_128 = arith.constant 6 : index
    %c3_129 = arith.constant 3 : index
    %249 = memref.load %arg3[%c6_128, %c3_129] : memref<16x4xf32, #tpu.memory_space<smem>>
    %250 = vector.broadcast %249 : f32 to vector<2x128xf32>
    %251 = arith.mulf %7, %250 : vector<2x128xf32>
    %252 = arith.addf %248, %251 : vector<2x128xf32>
    %cst_130 = arith.constant 5.000000e-01 : f32
    %253 = vector.broadcast %cst_130 : f32 to vector<2x128xf32>
    %254 = arith.mulf %253, %252 : vector<2x128xf32>
    %cst_131 = arith.constant 0.707106769 : f32
    %255 = vector.broadcast %cst_131 : f32 to vector<2x128xf32>
    %256 = arith.mulf %252, %255 : vector<2x128xf32>
    %257 = math.erf %256 : vector<2x128xf32>
    %cst_132 = arith.constant 1.000000e+00 : f32
    %258 = vector.broadcast %cst_132 : f32 to vector<2x128xf32>
    %259 = arith.addf %258, %257 : vector<2x128xf32>
    %260 = arith.mulf %254, %259 : vector<2x128xf32>
    %c0_133 = arith.constant 0 : index
    %c6_134 = arith.constant 6 : index
    %261 = memref.load %arg4[%c0_133, %c6_134] : memref<4x16xf32, #tpu.memory_space<smem>>
    %262 = vector.broadcast %261 : f32 to vector<2x128xf32>
    %263 = arith.mulf %260, %262 : vector<2x128xf32>
    %264 = arith.addf %225, %263 : vector<2x128xf32>
    %c1_135 = arith.constant 1 : index
    %c6_136 = arith.constant 6 : index
    %265 = memref.load %arg4[%c1_135, %c6_136] : memref<4x16xf32, #tpu.memory_space<smem>>
    %266 = vector.broadcast %265 : f32 to vector<2x128xf32>
    %267 = arith.mulf %260, %266 : vector<2x128xf32>
    %268 = arith.addf %229, %267 : vector<2x128xf32>
    %c2_137 = arith.constant 2 : index
    %c6_138 = arith.constant 6 : index
    %269 = memref.load %arg4[%c2_137, %c6_138] : memref<4x16xf32, #tpu.memory_space<smem>>
    %270 = vector.broadcast %269 : f32 to vector<2x128xf32>
    %271 = arith.mulf %260, %270 : vector<2x128xf32>
    %272 = arith.addf %233, %271 : vector<2x128xf32>
    %c3_139 = arith.constant 3 : index
    %c6_140 = arith.constant 6 : index
    %273 = memref.load %arg4[%c3_139, %c6_140] : memref<4x16xf32, #tpu.memory_space<smem>>
    %274 = vector.broadcast %273 : f32 to vector<2x128xf32>
    %275 = arith.mulf %260, %274 : vector<2x128xf32>
    %276 = arith.addf %237, %275 : vector<2x128xf32>
    %c7 = arith.constant 7 : index
    %c0_141 = arith.constant 0 : index
    %277 = memref.load %arg3[%c7, %c0_141] : memref<16x4xf32, #tpu.memory_space<smem>>
    %278 = vector.broadcast %277 : f32 to vector<2x128xf32>
    %279 = arith.mulf %1, %278 : vector<2x128xf32>
    %c7_142 = arith.constant 7 : index
    %c1_143 = arith.constant 1 : index
    %280 = memref.load %arg3[%c7_142, %c1_143] : memref<16x4xf32, #tpu.memory_space<smem>>
    %281 = vector.broadcast %280 : f32 to vector<2x128xf32>
    %282 = arith.mulf %3, %281 : vector<2x128xf32>
    %283 = arith.addf %279, %282 : vector<2x128xf32>
    %c7_144 = arith.constant 7 : index
    %c2_145 = arith.constant 2 : index
    %284 = memref.load %arg3[%c7_144, %c2_145] : memref<16x4xf32, #tpu.memory_space<smem>>
    %285 = vector.broadcast %284 : f32 to vector<2x128xf32>
    %286 = arith.mulf %5, %285 : vector<2x128xf32>
    %287 = arith.addf %283, %286 : vector<2x128xf32>
    %c7_146 = arith.constant 7 : index
    %c3_147 = arith.constant 3 : index
    %288 = memref.load %arg3[%c7_146, %c3_147] : memref<16x4xf32, #tpu.memory_space<smem>>
    %289 = vector.broadcast %288 : f32 to vector<2x128xf32>
    %290 = arith.mulf %7, %289 : vector<2x128xf32>
    %291 = arith.addf %287, %290 : vector<2x128xf32>
    %cst_148 = arith.constant 5.000000e-01 : f32
    %292 = vector.broadcast %cst_148 : f32 to vector<2x128xf32>
    %293 = arith.mulf %292, %291 : vector<2x128xf32>
    %cst_149 = arith.constant 0.707106769 : f32
    %294 = vector.broadcast %cst_149 : f32 to vector<2x128xf32>
    %295 = arith.mulf %291, %294 : vector<2x128xf32>
    %296 = math.erf %295 : vector<2x128xf32>
    %cst_150 = arith.constant 1.000000e+00 : f32
    %297 = vector.broadcast %cst_150 : f32 to vector<2x128xf32>
    %298 = arith.addf %297, %296 : vector<2x128xf32>
    %299 = arith.mulf %293, %298 : vector<2x128xf32>
    %c0_151 = arith.constant 0 : index
    %c7_152 = arith.constant 7 : index
    %300 = memref.load %arg4[%c0_151, %c7_152] : memref<4x16xf32, #tpu.memory_space<smem>>
    %301 = vector.broadcast %300 : f32 to vector<2x128xf32>
    %302 = arith.mulf %299, %301 : vector<2x128xf32>
    %303 = arith.addf %264, %302 : vector<2x128xf32>
    %c1_153 = arith.constant 1 : index
    %c7_154 = arith.constant 7 : index
    %304 = memref.load %arg4[%c1_153, %c7_154] : memref<4x16xf32, #tpu.memory_space<smem>>
    %305 = vector.broadcast %304 : f32 to vector<2x128xf32>
    %306 = arith.mulf %299, %305 : vector<2x128xf32>
    %307 = arith.addf %268, %306 : vector<2x128xf32>
    %c2_155 = arith.constant 2 : index
    %c7_156 = arith.constant 7 : index
    %308 = memref.load %arg4[%c2_155, %c7_156] : memref<4x16xf32, #tpu.memory_space<smem>>
    %309 = vector.broadcast %308 : f32 to vector<2x128xf32>
    %310 = arith.mulf %299, %309 : vector<2x128xf32>
    %311 = arith.addf %272, %310 : vector<2x128xf32>
    %c3_157 = arith.constant 3 : index
    %c7_158 = arith.constant 7 : index
    %312 = memref.load %arg4[%c3_157, %c7_158] : memref<4x16xf32, #tpu.memory_space<smem>>
    %313 = vector.broadcast %312 : f32 to vector<2x128xf32>
    %314 = arith.mulf %299, %313 : vector<2x128xf32>
    %315 = arith.addf %276, %314 : vector<2x128xf32>
    %c8 = arith.constant 8 : index
    %c0_159 = arith.constant 0 : index
    %316 = memref.load %arg3[%c8, %c0_159] : memref<16x4xf32, #tpu.memory_space<smem>>
    %317 = vector.broadcast %316 : f32 to vector<2x128xf32>
    %318 = arith.mulf %1, %317 : vector<2x128xf32>
    %c8_160 = arith.constant 8 : index
    %c1_161 = arith.constant 1 : index
    %319 = memref.load %arg3[%c8_160, %c1_161] : memref<16x4xf32, #tpu.memory_space<smem>>
    %320 = vector.broadcast %319 : f32 to vector<2x128xf32>
    %321 = arith.mulf %3, %320 : vector<2x128xf32>
    %322 = arith.addf %318, %321 : vector<2x128xf32>
    %c8_162 = arith.constant 8 : index
    %c2_163 = arith.constant 2 : index
    %323 = memref.load %arg3[%c8_162, %c2_163] : memref<16x4xf32, #tpu.memory_space<smem>>
    %324 = vector.broadcast %323 : f32 to vector<2x128xf32>
    %325 = arith.mulf %5, %324 : vector<2x128xf32>
    %326 = arith.addf %322, %325 : vector<2x128xf32>
    %c8_164 = arith.constant 8 : index
    %c3_165 = arith.constant 3 : index
    %327 = memref.load %arg3[%c8_164, %c3_165] : memref<16x4xf32, #tpu.memory_space<smem>>
    %328 = vector.broadcast %327 : f32 to vector<2x128xf32>
    %329 = arith.mulf %7, %328 : vector<2x128xf32>
    %330 = arith.addf %326, %329 : vector<2x128xf32>
    %cst_166 = arith.constant 5.000000e-01 : f32
    %331 = vector.broadcast %cst_166 : f32 to vector<2x128xf32>
    %332 = arith.mulf %331, %330 : vector<2x128xf32>
    %cst_167 = arith.constant 0.707106769 : f32
    %333 = vector.broadcast %cst_167 : f32 to vector<2x128xf32>
    %334 = arith.mulf %330, %333 : vector<2x128xf32>
    %335 = math.erf %334 : vector<2x128xf32>
    %cst_168 = arith.constant 1.000000e+00 : f32
    %336 = vector.broadcast %cst_168 : f32 to vector<2x128xf32>
    %337 = arith.addf %336, %335 : vector<2x128xf32>
    %338 = arith.mulf %332, %337 : vector<2x128xf32>
    %c0_169 = arith.constant 0 : index
    %c8_170 = arith.constant 8 : index
    %339 = memref.load %arg4[%c0_169, %c8_170] : memref<4x16xf32, #tpu.memory_space<smem>>
    %340 = vector.broadcast %339 : f32 to vector<2x128xf32>
    %341 = arith.mulf %338, %340 : vector<2x128xf32>
    %342 = arith.addf %303, %341 : vector<2x128xf32>
    %c1_171 = arith.constant 1 : index
    %c8_172 = arith.constant 8 : index
    %343 = memref.load %arg4[%c1_171, %c8_172] : memref<4x16xf32, #tpu.memory_space<smem>>
    %344 = vector.broadcast %343 : f32 to vector<2x128xf32>
    %345 = arith.mulf %338, %344 : vector<2x128xf32>
    %346 = arith.addf %307, %345 : vector<2x128xf32>
    %c2_173 = arith.constant 2 : index
    %c8_174 = arith.constant 8 : index
    %347 = memref.load %arg4[%c2_173, %c8_174] : memref<4x16xf32, #tpu.memory_space<smem>>
    %348 = vector.broadcast %347 : f32 to vector<2x128xf32>
    %349 = arith.mulf %338, %348 : vector<2x128xf32>
    %350 = arith.addf %311, %349 : vector<2x128xf32>
    %c3_175 = arith.constant 3 : index
    %c8_176 = arith.constant 8 : index
    %351 = memref.load %arg4[%c3_175, %c8_176] : memref<4x16xf32, #tpu.memory_space<smem>>
    %352 = vector.broadcast %351 : f32 to vector<2x128xf32>
    %353 = arith.mulf %338, %352 : vector<2x128xf32>
    %354 = arith.addf %315, %353 : vector<2x128xf32>
    %c9 = arith.constant 9 : index
    %c0_177 = arith.constant 0 : index
    %355 = memref.load %arg3[%c9, %c0_177] : memref<16x4xf32, #tpu.memory_space<smem>>
    %356 = vector.broadcast %355 : f32 to vector<2x128xf32>
    %357 = arith.mulf %1, %356 : vector<2x128xf32>
    %c9_178 = arith.constant 9 : index
    %c1_179 = arith.constant 1 : index
    %358 = memref.load %arg3[%c9_178, %c1_179] : memref<16x4xf32, #tpu.memory_space<smem>>
    %359 = vector.broadcast %358 : f32 to vector<2x128xf32>
    %360 = arith.mulf %3, %359 : vector<2x128xf32>
    %361 = arith.addf %357, %360 : vector<2x128xf32>
    %c9_180 = arith.constant 9 : index
    %c2_181 = arith.constant 2 : index
    %362 = memref.load %arg3[%c9_180, %c2_181] : memref<16x4xf32, #tpu.memory_space<smem>>
    %363 = vector.broadcast %362 : f32 to vector<2x128xf32>
    %364 = arith.mulf %5, %363 : vector<2x128xf32>
    %365 = arith.addf %361, %364 : vector<2x128xf32>
    %c9_182 = arith.constant 9 : index
    %c3_183 = arith.constant 3 : index
    %366 = memref.load %arg3[%c9_182, %c3_183] : memref<16x4xf32, #tpu.memory_space<smem>>
    %367 = vector.broadcast %366 : f32 to vector<2x128xf32>
    %368 = arith.mulf %7, %367 : vector<2x128xf32>
    %369 = arith.addf %365, %368 : vector<2x128xf32>
    %cst_184 = arith.constant 5.000000e-01 : f32
    %370 = vector.broadcast %cst_184 : f32 to vector<2x128xf32>
    %371 = arith.mulf %370, %369 : vector<2x128xf32>
    %cst_185 = arith.constant 0.707106769 : f32
    %372 = vector.broadcast %cst_185 : f32 to vector<2x128xf32>
    %373 = arith.mulf %369, %372 : vector<2x128xf32>
    %374 = math.erf %373 : vector<2x128xf32>
    %cst_186 = arith.constant 1.000000e+00 : f32
    %375 = vector.broadcast %cst_186 : f32 to vector<2x128xf32>
    %376 = arith.addf %375, %374 : vector<2x128xf32>
    %377 = arith.mulf %371, %376 : vector<2x128xf32>
    %c0_187 = arith.constant 0 : index
    %c9_188 = arith.constant 9 : index
    %378 = memref.load %arg4[%c0_187, %c9_188] : memref<4x16xf32, #tpu.memory_space<smem>>
    %379 = vector.broadcast %378 : f32 to vector<2x128xf32>
    %380 = arith.mulf %377, %379 : vector<2x128xf32>
    %381 = arith.addf %342, %380 : vector<2x128xf32>
    %c1_189 = arith.constant 1 : index
    %c9_190 = arith.constant 9 : index
    %382 = memref.load %arg4[%c1_189, %c9_190] : memref<4x16xf32, #tpu.memory_space<smem>>
    %383 = vector.broadcast %382 : f32 to vector<2x128xf32>
    %384 = arith.mulf %377, %383 : vector<2x128xf32>
    %385 = arith.addf %346, %384 : vector<2x128xf32>
    %c2_191 = arith.constant 2 : index
    %c9_192 = arith.constant 9 : index
    %386 = memref.load %arg4[%c2_191, %c9_192] : memref<4x16xf32, #tpu.memory_space<smem>>
    %387 = vector.broadcast %386 : f32 to vector<2x128xf32>
    %388 = arith.mulf %377, %387 : vector<2x128xf32>
    %389 = arith.addf %350, %388 : vector<2x128xf32>
    %c3_193 = arith.constant 3 : index
    %c9_194 = arith.constant 9 : index
    %390 = memref.load %arg4[%c3_193, %c9_194] : memref<4x16xf32, #tpu.memory_space<smem>>
    %391 = vector.broadcast %390 : f32 to vector<2x128xf32>
    %392 = arith.mulf %377, %391 : vector<2x128xf32>
    %393 = arith.addf %354, %392 : vector<2x128xf32>
    %c10 = arith.constant 10 : index
    %c0_195 = arith.constant 0 : index
    %394 = memref.load %arg3[%c10, %c0_195] : memref<16x4xf32, #tpu.memory_space<smem>>
    %395 = vector.broadcast %394 : f32 to vector<2x128xf32>
    %396 = arith.mulf %1, %395 : vector<2x128xf32>
    %c10_196 = arith.constant 10 : index
    %c1_197 = arith.constant 1 : index
    %397 = memref.load %arg3[%c10_196, %c1_197] : memref<16x4xf32, #tpu.memory_space<smem>>
    %398 = vector.broadcast %397 : f32 to vector<2x128xf32>
    %399 = arith.mulf %3, %398 : vector<2x128xf32>
    %400 = arith.addf %396, %399 : vector<2x128xf32>
    %c10_198 = arith.constant 10 : index
    %c2_199 = arith.constant 2 : index
    %401 = memref.load %arg3[%c10_198, %c2_199] : memref<16x4xf32, #tpu.memory_space<smem>>
    %402 = vector.broadcast %401 : f32 to vector<2x128xf32>
    %403 = arith.mulf %5, %402 : vector<2x128xf32>
    %404 = arith.addf %400, %403 : vector<2x128xf32>
    %c10_200 = arith.constant 10 : index
    %c3_201 = arith.constant 3 : index
    %405 = memref.load %arg3[%c10_200, %c3_201] : memref<16x4xf32, #tpu.memory_space<smem>>
    %406 = vector.broadcast %405 : f32 to vector<2x128xf32>
    %407 = arith.mulf %7, %406 : vector<2x128xf32>
    %408 = arith.addf %404, %407 : vector<2x128xf32>
    %cst_202 = arith.constant 5.000000e-01 : f32
    %409 = vector.broadcast %cst_202 : f32 to vector<2x128xf32>
    %410 = arith.mulf %409, %408 : vector<2x128xf32>
    %cst_203 = arith.constant 0.707106769 : f32
    %411 = vector.broadcast %cst_203 : f32 to vector<2x128xf32>
    %412 = arith.mulf %408, %411 : vector<2x128xf32>
    %413 = math.erf %412 : vector<2x128xf32>
    %cst_204 = arith.constant 1.000000e+00 : f32
    %414 = vector.broadcast %cst_204 : f32 to vector<2x128xf32>
    %415 = arith.addf %414, %413 : vector<2x128xf32>
    %416 = arith.mulf %410, %415 : vector<2x128xf32>
    %c0_205 = arith.constant 0 : index
    %c10_206 = arith.constant 10 : index
    %417 = memref.load %arg4[%c0_205, %c10_206] : memref<4x16xf32, #tpu.memory_space<smem>>
    %418 = vector.broadcast %417 : f32 to vector<2x128xf32>
    %419 = arith.mulf %416, %418 : vector<2x128xf32>
    %420 = arith.addf %381, %419 : vector<2x128xf32>
    %c1_207 = arith.constant 1 : index
    %c10_208 = arith.constant 10 : index
    %421 = memref.load %arg4[%c1_207, %c10_208] : memref<4x16xf32, #tpu.memory_space<smem>>
    %422 = vector.broadcast %421 : f32 to vector<2x128xf32>
    %423 = arith.mulf %416, %422 : vector<2x128xf32>
    %424 = arith.addf %385, %423 : vector<2x128xf32>
    %c2_209 = arith.constant 2 : index
    %c10_210 = arith.constant 10 : index
    %425 = memref.load %arg4[%c2_209, %c10_210] : memref<4x16xf32, #tpu.memory_space<smem>>
    %426 = vector.broadcast %425 : f32 to vector<2x128xf32>
    %427 = arith.mulf %416, %426 : vector<2x128xf32>
    %428 = arith.addf %389, %427 : vector<2x128xf32>
    %c3_211 = arith.constant 3 : index
    %c10_212 = arith.constant 10 : index
    %429 = memref.load %arg4[%c3_211, %c10_212] : memref<4x16xf32, #tpu.memory_space<smem>>
    %430 = vector.broadcast %429 : f32 to vector<2x128xf32>
    %431 = arith.mulf %416, %430 : vector<2x128xf32>
    %432 = arith.addf %393, %431 : vector<2x128xf32>
    %c11 = arith.constant 11 : index
    %c0_213 = arith.constant 0 : index
    %433 = memref.load %arg3[%c11, %c0_213] : memref<16x4xf32, #tpu.memory_space<smem>>
    %434 = vector.broadcast %433 : f32 to vector<2x128xf32>
    %435 = arith.mulf %1, %434 : vector<2x128xf32>
    %c11_214 = arith.constant 11 : index
    %c1_215 = arith.constant 1 : index
    %436 = memref.load %arg3[%c11_214, %c1_215] : memref<16x4xf32, #tpu.memory_space<smem>>
    %437 = vector.broadcast %436 : f32 to vector<2x128xf32>
    %438 = arith.mulf %3, %437 : vector<2x128xf32>
    %439 = arith.addf %435, %438 : vector<2x128xf32>
    %c11_216 = arith.constant 11 : index
    %c2_217 = arith.constant 2 : index
    %440 = memref.load %arg3[%c11_216, %c2_217] : memref<16x4xf32, #tpu.memory_space<smem>>
    %441 = vector.broadcast %440 : f32 to vector<2x128xf32>
    %442 = arith.mulf %5, %441 : vector<2x128xf32>
    %443 = arith.addf %439, %442 : vector<2x128xf32>
    %c11_218 = arith.constant 11 : index
    %c3_219 = arith.constant 3 : index
    %444 = memref.load %arg3[%c11_218, %c3_219] : memref<16x4xf32, #tpu.memory_space<smem>>
    %445 = vector.broadcast %444 : f32 to vector<2x128xf32>
    %446 = arith.mulf %7, %445 : vector<2x128xf32>
    %447 = arith.addf %443, %446 : vector<2x128xf32>
    %cst_220 = arith.constant 5.000000e-01 : f32
    %448 = vector.broadcast %cst_220 : f32 to vector<2x128xf32>
    %449 = arith.mulf %448, %447 : vector<2x128xf32>
    %cst_221 = arith.constant 0.707106769 : f32
    %450 = vector.broadcast %cst_221 : f32 to vector<2x128xf32>
    %451 = arith.mulf %447, %450 : vector<2x128xf32>
    %452 = math.erf %451 : vector<2x128xf32>
    %cst_222 = arith.constant 1.000000e+00 : f32
    %453 = vector.broadcast %cst_222 : f32 to vector<2x128xf32>
    %454 = arith.addf %453, %452 : vector<2x128xf32>
    %455 = arith.mulf %449, %454 : vector<2x128xf32>
    %c0_223 = arith.constant 0 : index
    %c11_224 = arith.constant 11 : index
    %456 = memref.load %arg4[%c0_223, %c11_224] : memref<4x16xf32, #tpu.memory_space<smem>>
    %457 = vector.broadcast %456 : f32 to vector<2x128xf32>
    %458 = arith.mulf %455, %457 : vector<2x128xf32>
    %459 = arith.addf %420, %458 : vector<2x128xf32>
    %c1_225 = arith.constant 1 : index
    %c11_226 = arith.constant 11 : index
    %460 = memref.load %arg4[%c1_225, %c11_226] : memref<4x16xf32, #tpu.memory_space<smem>>
    %461 = vector.broadcast %460 : f32 to vector<2x128xf32>
    %462 = arith.mulf %455, %461 : vector<2x128xf32>
    %463 = arith.addf %424, %462 : vector<2x128xf32>
    %c2_227 = arith.constant 2 : index
    %c11_228 = arith.constant 11 : index
    %464 = memref.load %arg4[%c2_227, %c11_228] : memref<4x16xf32, #tpu.memory_space<smem>>
    %465 = vector.broadcast %464 : f32 to vector<2x128xf32>
    %466 = arith.mulf %455, %465 : vector<2x128xf32>
    %467 = arith.addf %428, %466 : vector<2x128xf32>
    %c3_229 = arith.constant 3 : index
    %c11_230 = arith.constant 11 : index
    %468 = memref.load %arg4[%c3_229, %c11_230] : memref<4x16xf32, #tpu.memory_space<smem>>
    %469 = vector.broadcast %468 : f32 to vector<2x128xf32>
    %470 = arith.mulf %455, %469 : vector<2x128xf32>
    %471 = arith.addf %432, %470 : vector<2x128xf32>
    %c12 = arith.constant 12 : index
    %c0_231 = arith.constant 0 : index
    %472 = memref.load %arg3[%c12, %c0_231] : memref<16x4xf32, #tpu.memory_space<smem>>
    %473 = vector.broadcast %472 : f32 to vector<2x128xf32>
    %474 = arith.mulf %1, %473 : vector<2x128xf32>
    %c12_232 = arith.constant 12 : index
    %c1_233 = arith.constant 1 : index
    %475 = memref.load %arg3[%c12_232, %c1_233] : memref<16x4xf32, #tpu.memory_space<smem>>
    %476 = vector.broadcast %475 : f32 to vector<2x128xf32>
    %477 = arith.mulf %3, %476 : vector<2x128xf32>
    %478 = arith.addf %474, %477 : vector<2x128xf32>
    %c12_234 = arith.constant 12 : index
    %c2_235 = arith.constant 2 : index
    %479 = memref.load %arg3[%c12_234, %c2_235] : memref<16x4xf32, #tpu.memory_space<smem>>
    %480 = vector.broadcast %479 : f32 to vector<2x128xf32>
    %481 = arith.mulf %5, %480 : vector<2x128xf32>
    %482 = arith.addf %478, %481 : vector<2x128xf32>
    %c12_236 = arith.constant 12 : index
    %c3_237 = arith.constant 3 : index
    %483 = memref.load %arg3[%c12_236, %c3_237] : memref<16x4xf32, #tpu.memory_space<smem>>
    %484 = vector.broadcast %483 : f32 to vector<2x128xf32>
    %485 = arith.mulf %7, %484 : vector<2x128xf32>
    %486 = arith.addf %482, %485 : vector<2x128xf32>
    %cst_238 = arith.constant 5.000000e-01 : f32
    %487 = vector.broadcast %cst_238 : f32 to vector<2x128xf32>
    %488 = arith.mulf %487, %486 : vector<2x128xf32>
    %cst_239 = arith.constant 0.707106769 : f32
    %489 = vector.broadcast %cst_239 : f32 to vector<2x128xf32>
    %490 = arith.mulf %486, %489 : vector<2x128xf32>
    %491 = math.erf %490 : vector<2x128xf32>
    %cst_240 = arith.constant 1.000000e+00 : f32
    %492 = vector.broadcast %cst_240 : f32 to vector<2x128xf32>
    %493 = arith.addf %492, %491 : vector<2x128xf32>
    %494 = arith.mulf %488, %493 : vector<2x128xf32>
    %c0_241 = arith.constant 0 : index
    %c12_242 = arith.constant 12 : index
    %495 = memref.load %arg4[%c0_241, %c12_242] : memref<4x16xf32, #tpu.memory_space<smem>>
    %496 = vector.broadcast %495 : f32 to vector<2x128xf32>
    %497 = arith.mulf %494, %496 : vector<2x128xf32>
    %498 = arith.addf %459, %497 : vector<2x128xf32>
    %c1_243 = arith.constant 1 : index
    %c12_244 = arith.constant 12 : index
    %499 = memref.load %arg4[%c1_243, %c12_244] : memref<4x16xf32, #tpu.memory_space<smem>>
    %500 = vector.broadcast %499 : f32 to vector<2x128xf32>
    %501 = arith.mulf %494, %500 : vector<2x128xf32>
    %502 = arith.addf %463, %501 : vector<2x128xf32>
    %c2_245 = arith.constant 2 : index
    %c12_246 = arith.constant 12 : index
    %503 = memref.load %arg4[%c2_245, %c12_246] : memref<4x16xf32, #tpu.memory_space<smem>>
    %504 = vector.broadcast %503 : f32 to vector<2x128xf32>
    %505 = arith.mulf %494, %504 : vector<2x128xf32>
    %506 = arith.addf %467, %505 : vector<2x128xf32>
    %c3_247 = arith.constant 3 : index
    %c12_248 = arith.constant 12 : index
    %507 = memref.load %arg4[%c3_247, %c12_248] : memref<4x16xf32, #tpu.memory_space<smem>>
    %508 = vector.broadcast %507 : f32 to vector<2x128xf32>
    %509 = arith.mulf %494, %508 : vector<2x128xf32>
    %510 = arith.addf %471, %509 : vector<2x128xf32>
    %c13 = arith.constant 13 : index
    %c0_249 = arith.constant 0 : index
    %511 = memref.load %arg3[%c13, %c0_249] : memref<16x4xf32, #tpu.memory_space<smem>>
    %512 = vector.broadcast %511 : f32 to vector<2x128xf32>
    %513 = arith.mulf %1, %512 : vector<2x128xf32>
    %c13_250 = arith.constant 13 : index
    %c1_251 = arith.constant 1 : index
    %514 = memref.load %arg3[%c13_250, %c1_251] : memref<16x4xf32, #tpu.memory_space<smem>>
    %515 = vector.broadcast %514 : f32 to vector<2x128xf32>
    %516 = arith.mulf %3, %515 : vector<2x128xf32>
    %517 = arith.addf %513, %516 : vector<2x128xf32>
    %c13_252 = arith.constant 13 : index
    %c2_253 = arith.constant 2 : index
    %518 = memref.load %arg3[%c13_252, %c2_253] : memref<16x4xf32, #tpu.memory_space<smem>>
    %519 = vector.broadcast %518 : f32 to vector<2x128xf32>
    %520 = arith.mulf %5, %519 : vector<2x128xf32>
    %521 = arith.addf %517, %520 : vector<2x128xf32>
    %c13_254 = arith.constant 13 : index
    %c3_255 = arith.constant 3 : index
    %522 = memref.load %arg3[%c13_254, %c3_255] : memref<16x4xf32, #tpu.memory_space<smem>>
    %523 = vector.broadcast %522 : f32 to vector<2x128xf32>
    %524 = arith.mulf %7, %523 : vector<2x128xf32>
    %525 = arith.addf %521, %524 : vector<2x128xf32>
    %cst_256 = arith.constant 5.000000e-01 : f32
    %526 = vector.broadcast %cst_256 : f32 to vector<2x128xf32>
    %527 = arith.mulf %526, %525 : vector<2x128xf32>
    %cst_257 = arith.constant 0.707106769 : f32
    %528 = vector.broadcast %cst_257 : f32 to vector<2x128xf32>
    %529 = arith.mulf %525, %528 : vector<2x128xf32>
    %530 = math.erf %529 : vector<2x128xf32>
    %cst_258 = arith.constant 1.000000e+00 : f32
    %531 = vector.broadcast %cst_258 : f32 to vector<2x128xf32>
    %532 = arith.addf %531, %530 : vector<2x128xf32>
    %533 = arith.mulf %527, %532 : vector<2x128xf32>
    %c0_259 = arith.constant 0 : index
    %c13_260 = arith.constant 13 : index
    %534 = memref.load %arg4[%c0_259, %c13_260] : memref<4x16xf32, #tpu.memory_space<smem>>
    %535 = vector.broadcast %534 : f32 to vector<2x128xf32>
    %536 = arith.mulf %533, %535 : vector<2x128xf32>
    %537 = arith.addf %498, %536 : vector<2x128xf32>
    %c1_261 = arith.constant 1 : index
    %c13_262 = arith.constant 13 : index
    %538 = memref.load %arg4[%c1_261, %c13_262] : memref<4x16xf32, #tpu.memory_space<smem>>
    %539 = vector.broadcast %538 : f32 to vector<2x128xf32>
    %540 = arith.mulf %533, %539 : vector<2x128xf32>
    %541 = arith.addf %502, %540 : vector<2x128xf32>
    %c2_263 = arith.constant 2 : index
    %c13_264 = arith.constant 13 : index
    %542 = memref.load %arg4[%c2_263, %c13_264] : memref<4x16xf32, #tpu.memory_space<smem>>
    %543 = vector.broadcast %542 : f32 to vector<2x128xf32>
    %544 = arith.mulf %533, %543 : vector<2x128xf32>
    %545 = arith.addf %506, %544 : vector<2x128xf32>
    %c3_265 = arith.constant 3 : index
    %c13_266 = arith.constant 13 : index
    %546 = memref.load %arg4[%c3_265, %c13_266] : memref<4x16xf32, #tpu.memory_space<smem>>
    %547 = vector.broadcast %546 : f32 to vector<2x128xf32>
    %548 = arith.mulf %533, %547 : vector<2x128xf32>
    %549 = arith.addf %510, %548 : vector<2x128xf32>
    %c14 = arith.constant 14 : index
    %c0_267 = arith.constant 0 : index
    %550 = memref.load %arg3[%c14, %c0_267] : memref<16x4xf32, #tpu.memory_space<smem>>
    %551 = vector.broadcast %550 : f32 to vector<2x128xf32>
    %552 = arith.mulf %1, %551 : vector<2x128xf32>
    %c14_268 = arith.constant 14 : index
    %c1_269 = arith.constant 1 : index
    %553 = memref.load %arg3[%c14_268, %c1_269] : memref<16x4xf32, #tpu.memory_space<smem>>
    %554 = vector.broadcast %553 : f32 to vector<2x128xf32>
    %555 = arith.mulf %3, %554 : vector<2x128xf32>
    %556 = arith.addf %552, %555 : vector<2x128xf32>
    %c14_270 = arith.constant 14 : index
    %c2_271 = arith.constant 2 : index
    %557 = memref.load %arg3[%c14_270, %c2_271] : memref<16x4xf32, #tpu.memory_space<smem>>
    %558 = vector.broadcast %557 : f32 to vector<2x128xf32>
    %559 = arith.mulf %5, %558 : vector<2x128xf32>
    %560 = arith.addf %556, %559 : vector<2x128xf32>
    %c14_272 = arith.constant 14 : index
    %c3_273 = arith.constant 3 : index
    %561 = memref.load %arg3[%c14_272, %c3_273] : memref<16x4xf32, #tpu.memory_space<smem>>
    %562 = vector.broadcast %561 : f32 to vector<2x128xf32>
    %563 = arith.mulf %7, %562 : vector<2x128xf32>
    %564 = arith.addf %560, %563 : vector<2x128xf32>
    %cst_274 = arith.constant 5.000000e-01 : f32
    %565 = vector.broadcast %cst_274 : f32 to vector<2x128xf32>
    %566 = arith.mulf %565, %564 : vector<2x128xf32>
    %cst_275 = arith.constant 0.707106769 : f32
    %567 = vector.broadcast %cst_275 : f32 to vector<2x128xf32>
    %568 = arith.mulf %564, %567 : vector<2x128xf32>
    %569 = math.erf %568 : vector<2x128xf32>
    %cst_276 = arith.constant 1.000000e+00 : f32
    %570 = vector.broadcast %cst_276 : f32 to vector<2x128xf32>
    %571 = arith.addf %570, %569 : vector<2x128xf32>
    %572 = arith.mulf %566, %571 : vector<2x128xf32>
    %c0_277 = arith.constant 0 : index
    %c14_278 = arith.constant 14 : index
    %573 = memref.load %arg4[%c0_277, %c14_278] : memref<4x16xf32, #tpu.memory_space<smem>>
    %574 = vector.broadcast %573 : f32 to vector<2x128xf32>
    %575 = arith.mulf %572, %574 : vector<2x128xf32>
    %576 = arith.addf %537, %575 : vector<2x128xf32>
    %c1_279 = arith.constant 1 : index
    %c14_280 = arith.constant 14 : index
    %577 = memref.load %arg4[%c1_279, %c14_280] : memref<4x16xf32, #tpu.memory_space<smem>>
    %578 = vector.broadcast %577 : f32 to vector<2x128xf32>
    %579 = arith.mulf %572, %578 : vector<2x128xf32>
    %580 = arith.addf %541, %579 : vector<2x128xf32>
    %c2_281 = arith.constant 2 : index
    %c14_282 = arith.constant 14 : index
    %581 = memref.load %arg4[%c2_281, %c14_282] : memref<4x16xf32, #tpu.memory_space<smem>>
    %582 = vector.broadcast %581 : f32 to vector<2x128xf32>
    %583 = arith.mulf %572, %582 : vector<2x128xf32>
    %584 = arith.addf %545, %583 : vector<2x128xf32>
    %c3_283 = arith.constant 3 : index
    %c14_284 = arith.constant 14 : index
    %585 = memref.load %arg4[%c3_283, %c14_284] : memref<4x16xf32, #tpu.memory_space<smem>>
    %586 = vector.broadcast %585 : f32 to vector<2x128xf32>
    %587 = arith.mulf %572, %586 : vector<2x128xf32>
    %588 = arith.addf %549, %587 : vector<2x128xf32>
    %c15 = arith.constant 15 : index
    %c0_285 = arith.constant 0 : index
    %589 = memref.load %arg3[%c15, %c0_285] : memref<16x4xf32, #tpu.memory_space<smem>>
    %590 = vector.broadcast %589 : f32 to vector<2x128xf32>
    %591 = arith.mulf %1, %590 : vector<2x128xf32>
    %c15_286 = arith.constant 15 : index
    %c1_287 = arith.constant 1 : index
    %592 = memref.load %arg3[%c15_286, %c1_287] : memref<16x4xf32, #tpu.memory_space<smem>>
    %593 = vector.broadcast %592 : f32 to vector<2x128xf32>
    %594 = arith.mulf %3, %593 : vector<2x128xf32>
    %595 = arith.addf %591, %594 : vector<2x128xf32>
    %c15_288 = arith.constant 15 : index
    %c2_289 = arith.constant 2 : index
    %596 = memref.load %arg3[%c15_288, %c2_289] : memref<16x4xf32, #tpu.memory_space<smem>>
    %597 = vector.broadcast %596 : f32 to vector<2x128xf32>
    %598 = arith.mulf %5, %597 : vector<2x128xf32>
    %599 = arith.addf %595, %598 : vector<2x128xf32>
    %c15_290 = arith.constant 15 : index
    %c3_291 = arith.constant 3 : index
    %600 = memref.load %arg3[%c15_290, %c3_291] : memref<16x4xf32, #tpu.memory_space<smem>>
    %601 = vector.broadcast %600 : f32 to vector<2x128xf32>
    %602 = arith.mulf %7, %601 : vector<2x128xf32>
    %603 = arith.addf %599, %602 : vector<2x128xf32>
    %cst_292 = arith.constant 5.000000e-01 : f32
    %604 = vector.broadcast %cst_292 : f32 to vector<2x128xf32>
    %605 = arith.mulf %604, %603 : vector<2x128xf32>
    %cst_293 = arith.constant 0.707106769 : f32
    %606 = vector.broadcast %cst_293 : f32 to vector<2x128xf32>
    %607 = arith.mulf %603, %606 : vector<2x128xf32>
    %608 = math.erf %607 : vector<2x128xf32>
    %cst_294 = arith.constant 1.000000e+00 : f32
    %609 = vector.broadcast %cst_294 : f32 to vector<2x128xf32>
    %610 = arith.addf %609, %608 : vector<2x128xf32>
    %611 = arith.mulf %605, %610 : vector<2x128xf32>
    %c0_295 = arith.constant 0 : index
    %c15_296 = arith.constant 15 : index
    %612 = memref.load %arg4[%c0_295, %c15_296] : memref<4x16xf32, #tpu.memory_space<smem>>
    %613 = vector.broadcast %612 : f32 to vector<2x128xf32>
    %614 = arith.mulf %611, %613 : vector<2x128xf32>
    %615 = arith.addf %576, %614 : vector<2x128xf32>
    %c1_297 = arith.constant 1 : index
    %c15_298 = arith.constant 15 : index
    %616 = memref.load %arg4[%c1_297, %c15_298] : memref<4x16xf32, #tpu.memory_space<smem>>
    %617 = vector.broadcast %616 : f32 to vector<2x128xf32>
    %618 = arith.mulf %611, %617 : vector<2x128xf32>
    %619 = arith.addf %580, %618 : vector<2x128xf32>
    %c2_299 = arith.constant 2 : index
    %c15_300 = arith.constant 15 : index
    %620 = memref.load %arg4[%c2_299, %c15_300] : memref<4x16xf32, #tpu.memory_space<smem>>
    %621 = vector.broadcast %620 : f32 to vector<2x128xf32>
    %622 = arith.mulf %611, %621 : vector<2x128xf32>
    %623 = arith.addf %584, %622 : vector<2x128xf32>
    %c3_301 = arith.constant 3 : index
    %c15_302 = arith.constant 15 : index
    %624 = memref.load %arg4[%c3_301, %c15_302] : memref<4x16xf32, #tpu.memory_space<smem>>
    %625 = vector.broadcast %624 : f32 to vector<2x128xf32>
    %626 = arith.mulf %611, %625 : vector<2x128xf32>
    %627 = arith.addf %588, %626 : vector<2x128xf32>
    %cst_303 = arith.constant 5.000000e-01 : f32
    %628 = vector.broadcast %cst_303 : f32 to vector<2x128xf32>
    %629 = arith.mulf %628, %615 : vector<2x128xf32>
    %cst_304 = arith.constant 0.707106769 : f32
    %630 = vector.broadcast %cst_304 : f32 to vector<2x128xf32>
    %631 = arith.mulf %615, %630 : vector<2x128xf32>
    %632 = math.erf %631 : vector<2x128xf32>
    %cst_305 = arith.constant 1.000000e+00 : f32
    %633 = vector.broadcast %cst_305 : f32 to vector<2x128xf32>
    %634 = arith.addf %633, %632 : vector<2x128xf32>
    %635 = arith.mulf %629, %634 : vector<2x128xf32>
    %636 = arith.addf %635, %1 : vector<2x128xf32>
    %c0_306 = arith.constant 0 : index
    %c0_307 = arith.constant 0 : index
    %c0_308 = arith.constant 0 : index
    %c0_309 = arith.constant 0 : index
    %637 = vector.load %arg5[%c0_306, %c0_307, %c0_308, %c0_309] : memref<1x4x2x128xf32, #tpu.memory_space<vmem>>, vector<1x1x2x128xf32>
    %638 = vector.shape_cast %637 : vector<1x1x2x128xf32> to vector<2x128xf32>
    %639 = vector.shape_cast %636 : vector<2x128xf32> to vector<1x1x2x128xf32>
    tpu.vector_store %arg5[%c0_306, %c0_307, %c0_308, %c0_309], %639 {strides = array<i32>} : memref<1x4x2x128xf32, #tpu.memory_space<vmem>>, vector<1x1x2x128xf32>,
    %cst_310 = arith.constant 5.000000e-01 : f32
    %640 = vector.broadcast %cst_310 : f32 to vector<2x128xf32>
    %641 = arith.mulf %640, %619 : vector<2x128xf32>
    %cst_311 = arith.constant 0.707106769 : f32
    %642 = vector.broadcast %cst_311 : f32 to vector<2x128xf32>
    %643 = arith.mulf %619, %642 : vector<2x128xf32>
    %644 = math.erf %643 : vector<2x128xf32>
    %cst_312 = arith.constant 1.000000e+00 : f32
    %645 = vector.broadcast %cst_312 : f32 to vector<2x128xf32>
    %646 = arith.addf %645, %644 : vector<2x128xf32>
    %647 = arith.mulf %641, %646 : vector<2x128xf32>
    %648 = arith.addf %647, %3 : vector<2x128xf32>
    %c0_313 = arith.constant 0 : index
    %c1_314 = arith.constant 1 : index
    %c0_315 = arith.constant 0 : index
    %c0_316 = arith.constant 0 : index
    %649 = vector.load %arg5[%c0_313, %c1_314, %c0_315, %c0_316] : memref<1x4x2x128xf32, #tpu.memory_space<vmem>>, vector<1x1x2x128xf32>
    %650 = vector.shape_cast %649 : vector<1x1x2x128xf32> to vector<2x128xf32>
    %651 = vector.shape_cast %648 : vector<2x128xf32> to vector<1x1x2x128xf32>
    tpu.vector_store %arg5[%c0_313, %c1_314, %c0_315, %c0_316], %651 {strides = array<i32>} : memref<1x4x2x128xf32, #tpu.memory_space<vmem>>, vector<1x1x2x128xf32>,
    %cst_317 = arith.constant 5.000000e-01 : f32
    %652 = vector.broadcast %cst_317 : f32 to vector<2x128xf32>
    %653 = arith.mulf %652, %623 : vector<2x128xf32>
    %cst_318 = arith.constant 0.707106769 : f32
    %654 = vector.broadcast %cst_318 : f32 to vector<2x128xf32>
    %655 = arith.mulf %623, %654 : vector<2x128xf32>
    %656 = math.erf %655 : vector<2x128xf32>
    %cst_319 = arith.constant 1.000000e+00 : f32
    %657 = vector.broadcast %cst_319 : f32 to vector<2x128xf32>
    %658 = arith.addf %657, %656 : vector<2x128xf32>
    %659 = arith.mulf %653, %658 : vector<2x128xf32>
    %660 = arith.addf %659, %5 : vector<2x128xf32>
    %c0_320 = arith.constant 0 : index
    %c2_321 = arith.constant 2 : index
    %c0_322 = arith.constant 0 : index
    %c0_323 = arith.constant 0 : index
    %661 = vector.load %arg5[%c0_320, %c2_321, %c0_322, %c0_323] : memref<1x4x2x128xf32, #tpu.memory_space<vmem>>, vector<1x1x2x128xf32>
    %662 = vector.shape_cast %661 : vector<1x1x2x128xf32> to vector<2x128xf32>
    %663 = vector.shape_cast %660 : vector<2x128xf32> to vector<1x1x2x128xf32>
    tpu.vector_store %arg5[%c0_320, %c2_321, %c0_322, %c0_323], %663 {strides = array<i32>} : memref<1x4x2x128xf32, #tpu.memory_space<vmem>>, vector<1x1x2x128xf32>,
    %cst_324 = arith.constant 5.000000e-01 : f32
    %664 = vector.broadcast %cst_324 : f32 to vector<2x128xf32>
    %665 = arith.mulf %664, %627 : vector<2x128xf32>
    %cst_325 = arith.constant 0.707106769 : f32
    %666 = vector.broadcast %cst_325 : f32 to vector<2x128xf32>
    %667 = arith.mulf %627, %666 : vector<2x128xf32>
    %668 = math.erf %667 : vector<2x128xf32>
    %cst_326 = arith.constant 1.000000e+00 : f32
    %669 = vector.broadcast %cst_326 : f32 to vector<2x128xf32>
    %670 = arith.addf %669, %668 : vector<2x128xf32>
    %671 = arith.mulf %665, %670 : vector<2x128xf32>
    %672 = arith.addf %671, %7 : vector<2x128xf32>
    %c0_327 = arith.constant 0 : index
    %c3_328 = arith.constant 3 : index
    %c0_329 = arith.constant 0 : index
    %c0_330 = arith.constant 0 : index
    %673 = vector.load %arg5[%c0_327, %c3_328, %c0_329, %c0_330] : memref<1x4x2x128xf32, #tpu.memory_space<vmem>>, vector<1x1x2x128xf32>
    %674 = vector.shape_cast %673 : vector<1x1x2x128xf32> to vector<2x128xf32>
    %675 = vector.shape_cast %672 : vector<2x128xf32> to vector<1x1x2x128xf32>
    tpu.vector_store %arg5[%c0_327, %c3_328, %c0_329, %c0_330], %675 {strides = array<i32>} : memref<1x4x2x128xf32, #tpu.memory_space<vmem>>, vector<1x1x2x128xf32>,
    return
  }
  func.func @transform_0(%arg0: i32, %arg1: i32) -> (i32, i32, i32, i32) {
    %c0_i32 = arith.constant 0 : i32
    %c0_i32_0 = arith.constant 0 : i32
    %c0_i32_1 = arith.constant 0 : i32
    return %arg0, %c0_i32, %arg1, %c0_i32_0 : i32, i32, i32, i32
  }
  func.func @transform_1(%arg0: i32, %arg1: i32) -> (i32, i32) {
    %c0_i32 = arith.constant 0 : i32
    %c0_i32_0 = arith.constant 0 : i32
    %c0_i32_1 = arith.constant 0 : i32
    return %c0_i32, %c0_i32_0 : i32, i32
  }
  func.func @transform_2(%arg0: i32, %arg1: i32) -> (i32, i32) {
    %c0_i32 = arith.constant 0 : i32
    %c0_i32_0 = arith.constant 0 : i32
    %c0_i32_1 = arith.constant 0 : i32
    return %c0_i32, %c0_i32_0 : i32, i32
  }
  func.func @transform_3(%arg0: i32, %arg1: i32) -> (i32, i32, i32, i32) {
    %c0_i32 = arith.constant 0 : i32
    %c0_i32_0 = arith.constant 0 : i32
    %c0_i32_1 = arith.constant 0 : i32
    return %arg0, %c0_i32, %arg1, %c0_i32_0 : i32, i32, i32, i32
  }
}

</mosaic_0001>

<llo_original>
// kernel: tpu_custom_call.1
$region0: #{tpu_custom_call.1}
  #allocation0 [shape = 'u32[]', space=smem, size = 0x4, offset = 0x4, fixed_abs, tag = 'smem constant byte address 0x4 - core index']
  #allocation1 [shape = 'u32[144,128]{1,0:T(1,128)}', space=vmem, size = 0x12000, scoped, tag = 'internal scratch']
  %s0 = inlined_call_operand.vmem [shape: f32[2,4,2,128], index: 0, kind: input, shape index: {}]
  %s1 = inlined_call_operand.vmem [shape: f32[16,4], index: 1, kind: input, shape index: {}]
  %s2 = inlined_call_operand.vmem [shape: f32[4,16], index: 2, kind: input, shape index: {}]
  %s3 = inlined_call_operand.hbm [shape: f32[2,4,2,128], index: 3, kind: output, shape index: {}]
  %s4 = sld [smem:[#allocation0]]
  $region53: #{tpu_custom_call.1} parent=0
    _
  %s6 = ssub.s32 1, %s4
  %s7 = scalar_select 0, %s6, %s4
  $region1: #{tpu_custom_call.1} parent=0
    #allocation2 [shape = 'u8[8192]{0}', space=smem, size = 0x2000, scoped, tag = 'input window, operand 1, single buffered']
    #allocation3 [shape = 's32[2]{0}', space=sflag, size = 0x8, scoped, tag = 'scoped memory for tpu_custom_call.1']
    #allocation4 [shape = 's32[2]{0}', space=sflag, size = 0x8, scoped, tag = 'scoped memory for tpu_custom_call.1']
    #allocation5 [shape = 'u8[2048]{0}', space=smem, size = 0x800, scoped, tag = 'input window, operand 2, single buffered']
    #allocation6 [shape = 's32[1]{0}', space=sflag, size = 0x4, scoped, tag = 'scoped memory for tpu_custom_call.1']
    #allocation7 [shape = 'u8[8192]{0}', space=vmem, size = 0x2000, scoped, tag = 'output window, operand 0']
    %8 = vsyncpa [#allocation4], 0
    %9 = vsyncpa [#allocation6], 0
    %10 = vsyncpa [#allocation3], 0
    %s11 = scalar_lea.sflag [#allocation3], 1
    %12 = vsyncpa %s11, 0
    loop: start=0, step=1, limit=4
    $region2: #{tpu_custom_call.1} parent=1 // loop_pre_header
      _
    $region3: #{tpu_custom_call.1} parent=1 // loop_header
      %s14 = sphi 0, %s18
      %p15 = scmp.ge.s32.totalorder %s14, 4
      %s21 = sphi 0, %s33
      %s22 = sphi 0, %s29
      %s23 = sphi 0, %s21
      %s24 = sphi 0, %s22
      %s25 = sphi 0, %s23
      %s26 = sphi 0, %s24
      %s38 = sphi 0, %s40
      %s41 = sphi 0, %s38
      %s42 = sphi 0, %s41
      %s58 = sphi 0, %s42
      %s62 = sphi 0, %s62
      %s64 = sphi 0, %s62
      %s65 = sphi 0, %s64
      %s79 = sphi 0, %s65
      %s83 = sphi 0, %s83
      %s85 = sphi 0, %s83
      %s86 = sphi 0, %s85
      %s100 = sphi 0, %s86
      %s108 = sphi 0, %s110
      %s111 = sphi 0, %s108
      %s112 = sphi 0, %s111
      %s128 = sphi 0, %s112
    $region4: #{tpu_custom_call.1} parent=1 // loop_header_branch
      %17 = sbr.rel (%p15) target = $region8
    $region5: #{tpu_custom_call.1} parent=1 // loop_body
      %s19 = ssub.s32 %s14, 1
      %s20 = ssub.s32 %s14, 2
      %s27 = sadd.s32 1, %s22
      %p28 = scmp.ge.s32.totalorder %s27, 1
      %s29 = scalar_select %p28, 0, %s27
      %s30 = sadd.s32 1, %s21
      %s31 = scalar_select %p28, %s30, %s21
      %p32 = scmp.ge.s32.totalorder %s31, 2
      %s33 = scalar_select %p32, 0, %s31
      %s34 = ssub.s32 %s21, %s33
      %s35 = ssub.s32 %s22, %s29
      %s36 = sor.u32 %s34, %s35
      %p37 = scmp.eq.s32.totalorder %s36, 0
      %s39 = sadd.s32 %s38, 1
      %s40 = scalar_select %p37, %s38, %s39
      %p43 = pneg %p37
      %p44 = scmp.eq.s32.totalorder %s14, 1
      %p45 = por %p43, %p44
      %p46 = scmp.ne.s32.totalorder %s38, %s41
      %p47 = scmp.eq.s32.totalorder %s14, 0
      %p48 = por %p46, %p47
      %p49 = scmp.ne.s32.totalorder %s38, %s41
      %p50 = scmp.eq.s32.totalorder %s19, 1
      %p51 = por %p49, %p50
      %p52 = scmp.ne.s32.totalorder %s41, %s42
      %p53 = scmp.eq.s32.totalorder %s19, 0
      %p54 = por %p52, %p53
      %p55 = scmp.ne.s32.totalorder %s41, %s42
      %p56 = scmp.eq.s32.totalorder %s20, 1
      %p57 = por %p55, %p56
      %p59 = scmp.ne.s32.totalorder %s42, %s58
      %p60 = scmp.eq.s32.totalorder %s20, 0
      %p61 = por %p59, %p60
      %s63 = sadd.s32 %s62, 1
      %p66 = scmp.eq.s32.totalorder %s14, 1
      %p67 = scmp.ne.s32.totalorder %s62, %s64
      %p68 = scmp.eq.s32.totalorder %s14, 0
      %p69 = por %p67, %p68
      %p70 = scmp.ne.s32.totalorder %s62, %s64
      %p71 = scmp.eq.s32.totalorder %s19, 1
      %p72 = por %p70, %p71
      %p73 = scmp.ne.s32.totalorder %s64, %s65
      %p74 = scmp.eq.s32.totalorder %s19, 0
      %p75 = por %p73, %p74
      %p76 = scmp.ne.s32.totalorder %s64, %s65
      %p77 = scmp.eq.s32.totalorder %s20, 1
      %p78 = por %p76, %p77
      %p80 = scmp.ne.s32.totalorder %s65, %s79
      %p81 = scmp.eq.s32.totalorder %s20, 0
      %p82 = por %p80, %p81
      %s84 = sadd.s32 %s83, 1
      %p87 = scmp.eq.s32.totalorder %s14, 1
      %p88 = scmp.ne.s32.totalorder %s83, %s85
      %p89 = scmp.eq.s32.totalorder %s14, 0
      %p90 = por %p88, %p89
      %p91 = scmp.ne.s32.totalorder %s83, %s85
      %p92 = scmp.eq.s32.totalorder %s19, 1
      %p93 = por %p91, %p92
      %p94 = scmp.ne.s32.totalorder %s85, %s86
      %p95 = scmp.eq.s32.totalorder %s19, 0
      %p96 = por %p94, %p95
      %p97 = scmp.ne.s32.totalorder %s85, %s86
      %p98 = scmp.eq.s32.totalorder %s20, 1
      %p99 = por %p97, %p98
      %p101 = scmp.ne.s32.totalorder %s86, %s100
      %p102 = scmp.eq.s32.totalorder %s20, 0
      %p103 = por %p101, %p102
      %s104 = ssub.s32 %s21, %s33
      %s105 = ssub.s32 %s22, %s29
      %s106 = sor.u32 %s104, %s105
      %p107 = scmp.eq.s32.totalorder %s106, 0
      %s109 = sadd.s32 %s108, 1
      %s110 = scalar_select %p107, %s108, %s109
      %p113 = pneg %p107
      %p114 = scmp.eq.s32.totalorder %s14, 1
      %p115 = por %p113, %p114
      %p116 = scmp.ne.s32.totalorder %s108, %s111
      %p117 = scmp.eq.s32.totalorder %s14, 0
      %p118 = por %p116, %p117
      %p119 = scmp.ne.s32.totalorder %s108, %s111
      %p120 = scmp.eq.s32.totalorder %s19, 1
      %p121 = por %p119, %p120
      %p122 = scmp.ne.s32.totalorder %s111, %s112
      %p123 = scmp.eq.s32.totalorder %s19, 0
      %p124 = por %p122, %p123
      %p125 = scmp.ne.s32.totalorder %s111, %s112
      %p126 = scmp.eq.s32.totalorder %s20, 1
      %p127 = por %p125, %p126
      %p129 = scmp.ne.s32.totalorder %s112, %s128
      %p130 = scmp.eq.s32.totalorder %s20, 0
      %p131 = por %p129, %p130
      %p132 = scmp.le.s32.totalorder 1, %s14
      %p133 = scmp.lt.s32.totalorder %s14, 3
      %p134 = pnand %p132, %p133
      %p135 = pneg %p134
      // Predicated region
      $region9: #{tpu_custom_call.1} parent=5 // pred_check
        _
      $region10: #{tpu_custom_call.1} parent=5 // pred_check_branch
        %137 = sbr.rel (%p134) target = $region12
      $region11: #{tpu_custom_call.1} parent=5 // pred_region
        %s138 = ssub.s32 %s14, 1
        // Predicated region
        $region13: #{tpu_custom_call.1} parent=11 // pred_check
          %p139 = pneg %p75
        $region14: #{tpu_custom_call.1} parent=11 // pred_check_branch
          %141 = sbr.rel (%p139) target = $region16
        $region15: #{tpu_custom_call.1} parent=11 // pred_region
          %s143 = ssub.s32 256, 256
          %144 = vsyncadd [#allocation4], %s143
          %s145 = sshll.u32 %s1, 4
          %s146 = int_to_ptr.vmem [resolvable:$true] %s145
          %151 = dma.vmem_to_smem %s146, 256, [#allocation2], [#allocation4], 128, 128, 8
        $region16: #{tpu_custom_call.1} parent=11 // pred_fallthru
          _
        // Predicated region
        $region17: #{tpu_custom_call.1} parent=11 // pred_check
          %p152 = pneg %p96
        $region18: #{tpu_custom_call.1} parent=11 // pred_check_branch
          %154 = sbr.rel (%p152) target = $region20
        $region19: #{tpu_custom_call.1} parent=11 // pred_region
          %s156 = ssub.s32 64, 64
          %157 = vsyncadd [#allocation6], %s156
          %s159 = sshll.u32 %s2, 4
          %s160 = int_to_ptr.vmem [resolvable:$true] %s159
          %162 = dma.vmem_to_smem %s160, 64, [#allocation5], [#allocation6]
        $region20: #{tpu_custom_call.1} parent=11 // pred_fallthru
          _
      $region12: #{tpu_custom_call.1} parent=5 // pred_fallthru
        _
      %p163 = scmp.lt.s32.totalorder %s14, 2
      // Predicated region
      $region21: #{tpu_custom_call.1} parent=5 // pred_check
        %p164 = pneg %p163
      $region22: #{tpu_custom_call.1} parent=5 // pred_check_branch
        %166 = sbr.rel (%p164) target = $region24
      $region23: #{tpu_custom_call.1} parent=5 // pred_region
        // Predicated region
        $region25: #{tpu_custom_call.1} parent=23 // pred_check
          %p167 = pneg %p48
        $region26: #{tpu_custom_call.1} parent=23 // pred_check_branch
          %169 = sbr.rel (%p167) target = $region28
        $region27: #{tpu_custom_call.1} parent=23 // pred_region
          %p170 = scmp.lt.s32.totalorder %s21, 1
          %s171 = scalar_select %p170, %s21, 1
          %p172 = scmp.lt.s32.totalorder %s22, 0
          %s173 = scalar_select %p172, %s22, 0
          %s174 = smul.addr %s171, 4
          %s175 = sadd.s32 %s173, %s174
          %s176 = smul.addr %s175, 2
          %s177 = scalar_lea.vmem %s0, %s176
        $region28: #{tpu_custom_call.1} parent=23 // pred_fallthru
          _
      $region24: #{tpu_custom_call.1} parent=5 // pred_fallthru
        _
      %p178 = scmp.le.s32.totalorder 1, %s14
      %p179 = scmp.lt.s32.totalorder %s14, 3
      %p180 = pnand %p178, %p179
      %p181 = pneg %p180
      // Predicated region
      $region29: #{tpu_custom_call.1} parent=5 // pred_check
        _
      $region30: #{tpu_custom_call.1} parent=5 // pred_check_branch
        %183 = sbr.rel (%p180) target = $region32
      $region31: #{tpu_custom_call.1} parent=5 // pred_region
        %s184 = ssub.s32 %s14, 1
        // Predicated region
        $region33: #{tpu_custom_call.1} parent=31 // pred_check
          %p185 = pneg %p75
        $region34: #{tpu_custom_call.1} parent=31 // pred_check_branch
          %187 = sbr.rel (%p185) target = $region36
        $region35: #{tpu_custom_call.1} parent=31 // pred_region
          %188 = dma.done [#allocation4], 256
        $region36: #{tpu_custom_call.1} parent=31 // pred_fallthru
          _
        // Predicated region
        $region37: #{tpu_custom_call.1} parent=31 // pred_check
          %p189 = pneg %p96
        $region38: #{tpu_custom_call.1} parent=31 // pred_check_branch
          %191 = sbr.rel (%p189) target = $region40
        $region39: #{tpu_custom_call.1} parent=31 // pred_region
          %192 = dma.done [#allocation6], 64
        $region40: #{tpu_custom_call.1} parent=31 // pred_fallthru
          _
        %193 = sfence
        %p194 = scmp.lt.s32.totalorder %s23, 1
        %s195 = scalar_select %p194, %s23, 1
        %p196 = scmp.lt.s32.totalorder %s24, 0
        %s197 = scalar_select %p196, %s24, 0
        %s198 = smul.addr %s195, 4
        %s199 = sadd.s32 %s197, %s198
        %s200 = smul.addr %s199, 2
        %s201 = scalar_lea.vmem %s0, %s200
        %p202 = pneg %p54
        %p203 = pneg %p51
        %p204 = pneg %p75
        %p205 = pneg %p72
        %p206 = pneg %p96
        %p207 = pneg %p93
        %p208 = pneg %p124
        %p209 = pneg %p121
        %s210 = sand.u32 %s111, 1
        %s211 = scalar_lea.sflag [#allocation3], %s210
        %s212 = sand.u32 %s111, 1
        %s213 = smul.addr %s212, 8
        %s214 = scalar_lea.vmem [#allocation7], %s213
        %p215 = scmp.lt.s32.totalorder %s23, 1
        %s216 = scalar_select %p215, %s23, 1
        %p217 = scmp.lt.s32.totalorder %s24, 0
        %s218 = scalar_select %p217, %s24, 0
        %s219 = smul.addr %s216, 4
        %s220 = sadd.s32 %s218, %s219
        %s221 = smul.addr %s220, 2
        %s222 = scalar_lea.vmem %s0, %s221
        %v223 = vld [vmem:[%s222] sm:$0x3]
        %s224 = scalar_lea.vmem %s222, 2
        %v225 = vld [vmem:[%s224] sm:$0x3]
        %s226 = scalar_lea.vmem %s222, 4
        %v227 = vld [vmem:[%s226] sm:$0x3]
        %s228 = scalar_lea.vmem %s222, 6
        %v229 = vld [vmem:[%s228] sm:$0x3]
        %s230 = sld [smem:[#allocation2]]
        %v231 = vstv %s230
        %v232 = vmul.f32 %v223, %v231
        %s233 = sld [smem:[#allocation2 + $0x1]]
        %v234 = vstv %s233
        %v235 = vmul.f32 %v225, %v234
        %v236 = vadd.f32 %v232, %v235
        %s237 = sld [smem:[#allocation2 + $0x2]]
        %v238 = vstv %s237
        %v239 = vmul.f32 %v227, %v238
        %v240 = vadd.f32 %v236, %v239
        %s241 = sld [smem:[#allocation2 + $0x3]]
        %v242 = vstv %s241
        %v243 = vmul.f32 %v229, %v242
        %v244 = vadd.f32 %v240, %v243
        %v245 = vmul.f32 %v244, 0.5
        %v246 = vmul.f32 %v244, 0.70710677
        %v247 = verf.f32.pop %v246
        %v248 = vadd.f32 %v247, 1.0
        %v249 = vmul.f32 %v245, %v248
        %s250 = sld [smem:[#allocation5]]
        %v251 = vstv %s250
        %v252 = vmul.f32 %v249, %v251
        %s253 = sld [smem:[#allocation5 + $0x80]]
        %v254 = vstv %s253
        %v255 = vmul.f32 %v249, %v254
        %s256 = sld [smem:[#allocation5 + $0x100]]
        %v257 = vstv %s256
        %v258 = vmul.f32 %v249, %v257
        %s259 = sld [smem:[#allocation5 + $0x180]]
        %v260 = vstv %s259
        %v261 = vmul.f32 %v249, %v260
        %s262 = sld [smem:[#allocation2 + $0x80]]
        %v263 = vstv %s262
        %v264 = vmul.f32 %v223, %v263
        %s265 = sld [smem:[#allocation2 + $0x81]]
        %v266 = vstv %s265
        %v267 = vmul.f32 %v225, %v266
        %v268 = vadd.f32 %v264, %v267
        %s269 = sld [smem:[#allocation2 + $0x82]]
        %v270 = vstv %s269
        %v271 = vmul.f32 %v227, %v270
        %v272 = vadd.f32 %v268, %v271
        %s273 = sld [smem:[#allocation2 + $0x83]]
        %v274 = vstv %s273
        %v275 = vmul.f32 %v229, %v274
        %v276 = vadd.f32 %v272, %v275
        %v277 = vmul.f32 %v276, 0.5
        %v278 = vmul.f32 %v276, 0.70710677
        %v279 = verf.f32.pop %v278
        %v280 = vadd.f32 %v279, 1.0
        %v281 = vmul.f32 %v277, %v280
        %s282 = sld [smem:[#allocation5 + $0x1]]
        %v283 = vstv %s282
        %v284 = vmul.f32 %v281, %v283
        %v285 = vadd.f32 %v252, %v284
        %s286 = sld [smem:[#allocation5 + $0x81]]
        %v287 = vstv %s286
        %v288 = vmul.f32 %v281, %v287
        %v289 = vadd.f32 %v255, %v288
        %s290 = sld [smem:[#allocation5 + $0x101]]
        %v291 = vstv %s290
        %v292 = vmul.f32 %v281, %v291
        %v293 = vadd.f32 %v258, %v292
        %s294 = sld [smem:[#allocation5 + $0x181]]
        %v295 = vstv %s294
        %v296 = vmul.f32 %v281, %v295
        %v297 = vadd.f32 %v261, %v296
        %s298 = sld [smem:[#allocation2 + $0x100]]
        %v299 = vstv %s298
        %v300 = vmul.f32 %v223, %v299
        %s301 = sld [smem:[#allocation2 + $0x101]]
        %v302 = vstv %s301
        %v303 = vmul.f32 %v225, %v302
        %v304 = vadd.f32 %v300, %v303
        %s305 = sld [smem:[#allocation2 + $0x102]]
        %v306 = vstv %s305
        %v307 = vmul.f32 %v227, %v306
        %v308 = vadd.f32 %v304, %v307
        %s309 = sld [smem:[#allocation2 + $0x103]]
        %v310 = vstv %s309
        %v311 = vmul.f32 %v229, %v310
        %v312 = vadd.f32 %v308, %v311
        %v313 = vmul.f32 %v312, 0.5
        %v314 = vmul.f32 %v312, 0.70710677
        %v315 = verf.f32.pop %v314
        %v316 = vadd.f32 %v315, 1.0
        %v317 = vmul.f32 %v313, %v316
        %s318 = sld [smem:[#allocation5 + $0x2]]
        %v319 = vstv %s318
        %v320 = vmul.f32 %v317, %v319
        %v321 = vadd.f32 %v285, %v320
        %s322 = sld [smem:[#allocation5 + $0x82]]
        %v323 = vstv %s322
        %v324 = vmul.f32 %v317, %v323
        %v325 = vadd.f32 %v289, %v324
        %s326 = sld [smem:[#allocation5 + $0x102]]
        %v327 = vstv %s326
        %v328 = vmul.f32 %v317, %v327
        %v329 = vadd.f32 %v293, %v328
        %s330 = sld [smem:[#allocation5 + $0x182]]
        %v331 = vstv %s330
        %v332 = vmul.f32 %v317, %v331
        %v333 = vadd.f32 %v297, %v332
        %s334 = sld [smem:[#allocation2 + $0x180]]
        %v335 = vstv %s334
        %v336 = vmul.f32 %v223, %v335
        %s337 = sld [smem:[#allocation2 + $0x181]]
        %v338 = vstv %s337
        %v339 = vmul.f32 %v225, %v338
        %v340 = vadd.f32 %v336, %v339
        %s341 = sld [smem:[#allocation2 + $0x182]]
        %v342 = vstv %s341
        %v343 = vmul.f32 %v227, %v342
        %v344 = vadd.f32 %v340, %v343
        %s345 = sld [smem:[#allocation2 + $0x183]]
        %v346 = vstv %s345
        %v347 = vmul.f32 %v229, %v346
        %v348 = vadd.f32 %v344, %v347
        %v349 = vmul.f32 %v348, 0.5
        %v350 = vmul.f32 %v348, 0.70710677
        %v351 = verf.f32.pop %v350
        %v352 = vadd.f32 %v351, 1.0
        %v353 = vmul.f32 %v349, %v352
        %s354 = sld [smem:[#allocation5 + $0x3]]
        %v355 = vstv %s354
        %v356 = vmul.f32 %v353, %v355
        %v357 = vadd.f32 %v321, %v356
        %s358 = sld [smem:[#allocation5 + $0x83]]
        %v359 = vstv %s358
        %v360 = vmul.f32 %v353, %v359
        %v361 = vadd.f32 %v325, %v360
        %s362 = sld [smem:[#allocation5 + $0x103]]
        %v363 = vstv %s362
        %v364 = vmul.f32 %v353, %v363
        %v365 = vadd.f32 %v329, %v364
        %s366 = sld [smem:[#allocation5 + $0x183]]
        %v367 = vstv %s366
        %v368 = vmul.f32 %v353, %v367
        %v369 = vadd.f32 %v333, %v368
        %s370 = sld [smem:[#allocation2 + $0x200]]
        %v371 = vstv %s370
        %v372 = vmul.f32 %v223, %v371
        %s373 = sld [smem:[#allocation2 + $0x201]]
        %v374 = vstv %s373
        %v375 = vmul.f32 %v225, %v374
        %v376 = vadd.f32 %v372, %v375
        %s377 = sld [smem:[#allocation2 + $0x202]]
        %v378 = vstv %s377
        %v379 = vmul.f32 %v227, %v378
        %v380 = vadd.f32 %v376, %v379
        %s381 = sld [smem:[#allocation2 + $0x203]]
        %v382 = vstv %s381
        %v383 = vmul.f32 %v229, %v382
        %v384 = vadd.f32 %v380, %v383
        %v385 = vmul.f32 %v384, 0.5
        %v386 = vmul.f32 %v384, 0.70710677
        %v387 = verf.f32.pop %v386
        %v388 = vadd.f32 %v387, 1.0
        %v389 = vmul.f32 %v385, %v388
        %s390 = sld [smem:[#allocation5 + $0x4]]
        %v391 = vstv %s390
        %v392 = vmul.f32 %v389, %v391
        %v393 = vadd.f32 %v357, %v392
        %s394 = sld [smem:[#allocation5 + $0x84]]
        %v395 = vstv %s394
        %v396 = vmul.f32 %v389, %v395
        %v397 = vadd.f32 %v361, %v396
        %s398 = sld [smem:[#allocation5 + $0x104]]
        %v399 = vstv %s398
        %v400 = vmul.f32 %v389, %v399
        %v401 = vadd.f32 %v365, %v400
        %s402 = sld [smem:[#allocation5 + $0x184]]
        %v403 = vstv %s402
        %v404 = vmul.f32 %v389, %v403
        %v405 = vadd.f32 %v369, %v404
        %s406 = sld [smem:[#allocation2 + $0x280]]
        %v407 = vstv %s406
        %v408 = vmul.f32 %v223, %v407
        %s409 = sld [smem:[#allocation2 + $0x281]]
        %v410 = vstv %s409
        %v411 = vmul.f32 %v225, %v410
        %v412 = vadd.f32 %v408, %v411
        %s413 = sld [smem:[#allocation2 + $0x282]]
        %v414 = vstv %s413
        %v415 = vmul.f32 %v227, %v414
        %v416 = vadd.f32 %v412, %v415
        %s417 = sld [smem:[#allocation2 + $0x283]]
        %v418 = vstv %s417
        %v419 = vmul.f32 %v229, %v418
        %v420 = vadd.f32 %v416, %v419
        %v421 = vmul.f32 %v420, 0.5
        %v422 = vmul.f32 %v420, 0.70710677
        %v423 = verf.f32.pop %v422
        %v424 = vadd.f32 %v423, 1.0
        %v425 = vmul.f32 %v421, %v424
        %s426 = sld [smem:[#allocation5 + $0x5]]
        %v427 = vstv %s426
        %v428 = vmul.f32 %v425, %v427
        %v429 = vadd.f32 %v393, %v428
        %s430 = sld [smem:[#allocation5 + $0x85]]
        %v431 = vstv %s430
        %v432 = vmul.f32 %v425, %v431
        %v433 = vadd.f32 %v397, %v432
        %s434 = sld [smem:[#allocation5 + $0x105]]
        %v435 = vstv %s434
        %v436 = vmul.f32 %v425, %v435
        %v437 = vadd.f32 %v401, %v436
        %s438 = sld [smem:[#allocation5 + $0x185]]
        %v439 = vstv %s438
        %v440 = vmul.f32 %v425, %v439
        %v441 = vadd.f32 %v405, %v440
        %s442 = sld [smem:[#allocation2 + $0x300]]
        %v443 = vstv %s442
        %v444 = vmul.f32 %v223, %v443
        %s445 = sld [smem:[#allocation2 + $0x301]]
        %v446 = vstv %s445
        %v447 = vmul.f32 %v225, %v446
        %v448 = vadd.f32 %v444, %v447
        %s449 = sld [smem:[#allocation2 + $0x302]]
        %v450 = vstv %s449
        %v451 = vmul.f32 %v227, %v450
        %v452 = vadd.f32 %v448, %v451
        %s453 = sld [smem:[#allocation2 + $0x303]]
        %v454 = vstv %s453
        %v455 = vmul.f32 %v229, %v454
        %v456 = vadd.f32 %v452, %v455
        %v457 = vmul.f32 %v456, 0.5
        %v458 = vmul.f32 %v456, 0.70710677
        %v459 = verf.f32.pop %v458
        %v460 = vadd.f32 %v459, 1.0
        %v461 = vmul.f32 %v457, %v460
        %s462 = sld [smem:[#allocation5 + $0x6]]
        %v463 = vstv %s462
        %v464 = vmul.f32 %v461, %v463
        %v465 = vadd.f32 %v429, %v464
        %s466 = sld [smem:[#allocation5 + $0x86]]
        %v467 = vstv %s466
        %v468 = vmul.f32 %v461, %v467
        %v469 = vadd.f32 %v433, %v468
        %s470 = sld [smem:[#allocation5 + $0x106]]
        %v471 = vstv %s470
        %v472 = vmul.f32 %v461, %v471
        %v473 = vadd.f32 %v437, %v472
        %s474 = sld [smem:[#allocation5 + $0x186]]
        %v475 = vstv %s474
        %v476 = vmul.f32 %v461, %v475
        %v477 = vadd.f32 %v441, %v476
        %s478 = sld [smem:[#allocation2 + $0x380]]
        %v479 = vstv %s478
        %v480 = vmul.f32 %v223, %v479
        %s481 = sld [smem:[#allocation2 + $0x381]]
        %v482 = vstv %s481
        %v483 = vmul.f32 %v225, %v482
        %v484 = vadd.f32 %v480, %v483
        %s485 = sld [smem:[#allocation2 + $0x382]]
        %v486 = vstv %s485
        %v487 = vmul.f32 %v227, %v486
        %v488 = vadd.f32 %v484, %v487
        %s489 = sld [smem:[#allocation2 + $0x383]]
        %v490 = vstv %s489
        %v491 = vmul.f32 %v229, %v490
        %v492 = vadd.f32 %v488, %v491
        %v493 = vmul.f32 %v492, 0.5
        %v494 = vmul.f32 %v492, 0.70710677
        %v495 = verf.f32.pop %v494
        %v496 = vadd.f32 %v495, 1.0
        %v497 = vmul.f32 %v493, %v496
        %s498 = sld [smem:[#allocation5 + $0x7]]
        %v499 = vstv %s498
        %v500 = vmul.f32 %v497, %v499
        %v501 = vadd.f32 %v465, %v500
        %s502 = sld [smem:[#allocation5 + $0x87]]
        %v503 = vstv %s502
        %v504 = vmul.f32 %v497, %v503
        %v505 = vadd.f32 %v469, %v504
        %s506 = sld [smem:[#allocation5 + $0x107]]
        %v507 = vstv %s506
        %v508 = vmul.f32 %v497, %v507
        %v509 = vadd.f32 %v473, %v508
        %s510 = sld [smem:[#allocation5 + $0x187]]
        %v511 = vstv %s510
        %v512 = vmul.f32 %v497, %v511
        %v513 = vadd.f32 %v477, %v512
        %s514 = sld [smem:[#allocation2 + $0x400]]
        %v515 = vstv %s514
        %v516 = vmul.f32 %v223, %v515
        %s517 = sld [smem:[#allocation2 + $0x401]]
        %v518 = vstv %s517
        %v519 = vmul.f32 %v225, %v518
        %v520 = vadd.f32 %v516, %v519
        %s521 = sld [smem:[#allocation2 + $0x402]]
        %v522 = vstv %s521
        %v523 = vmul.f32 %v227, %v522
        %v524 = vadd.f32 %v520, %v523
        %s525 = sld [smem:[#allocation2 + $0x403]]
        %v526 = vstv %s525
        %v527 = vmul.f32 %v229, %v526
        %v528 = vadd.f32 %v524, %v527
        %v529 = vmul.f32 %v528, 0.5
        %v530 = vmul.f32 %v528, 0.70710677
        %v531 = verf.f32.pop %v530
        %v532 = vadd.f32 %v531, 1.0
        %v533 = vmul.f32 %v529, %v532
        %s534 = sld [smem:[#allocation5 + $0x8]]
        %v535 = vstv %s534
        %v536 = vmul.f32 %v533, %v535
        %v537 = vadd.f32 %v501, %v536
        %s538 = sld [smem:[#allocation5 + $0x88]]
        %v539 = vstv %s538
        %v540 = vmul.f32 %v533, %v539
        %v541 = vadd.f32 %v505, %v540
        %s542 = sld [smem:[#allocation5 + $0x108]]
        %v543 = vstv %s542
        %v544 = vmul.f32 %v533, %v543
        %v545 = vadd.f32 %v509, %v544
        %s546 = sld [smem:[#allocation5 + $0x188]]
        %v547 = vstv %s546
        %v548 = vmul.f32 %v533, %v547
        %v549 = vadd.f32 %v513, %v548
        %s550 = sld [smem:[#allocation2 + $0x480]]
        %v551 = vstv %s550
        %v552 = vmul.f32 %v223, %v551
        %s553 = sld [smem:[#allocation2 + $0x481]]
        %v554 = vstv %s553
        %v555 = vmul.f32 %v225, %v554
        %v556 = vadd.f32 %v552, %v555
        %s557 = sld [smem:[#allocation2 + $0x482]]
        %v558 = vstv %s557
        %v559 = vmul.f32 %v227, %v558
        %v560 = vadd.f32 %v556, %v559
        %s561 = sld [smem:[#allocation2 + $0x483]]
        %v562 = vstv %s561
        %v563 = vmul.f32 %v229, %v562
        %v564 = vadd.f32 %v560, %v563
        %v565 = vmul.f32 %v564, 0.5
        %v566 = vmul.f32 %v564, 0.70710677
        %v567 = verf.f32.pop %v566
        %v568 = vadd.f32 %v567, 1.0
        %v569 = vmul.f32 %v565, %v568
        %s570 = sld [smem:[#allocation5 + $0x9]]
        %v571 = vstv %s570
        %v572 = vmul.f32 %v569, %v571
        %v573 = vadd.f32 %v537, %v572
        %s574 = sld [smem:[#allocation5 + $0x89]]
        %v575 = vstv %s574
        %v576 = vmul.f32 %v569, %v575
        %v577 = vadd.f32 %v541, %v576
        %s578 = sld [smem:[#allocation5 + $0x109]]
        %v579 = vstv %s578
        %v580 = vmul.f32 %v569, %v579
        %v581 = vadd.f32 %v545, %v580
        %s582 = sld [smem:[#allocation5 + $0x189]]
        %v583 = vstv %s582
        %v584 = vmul.f32 %v569, %v583
        %v585 = vadd.f32 %v549, %v584
        %s586 = sld [smem:[#allocation2 + $0x500]]
        %v587 = vstv %s586
        %v588 = vmul.f32 %v223, %v587
        %s589 = sld [smem:[#allocation2 + $0x501]]
        %v590 = vstv %s589
        %v591 = vmul.f32 %v225, %v590
        %v592 = vadd.f32 %v588, %v591
        %s593 = sld [smem:[#allocation2 + $0x502]]
        %v594 = vstv %s593
        %v595 = vmul.f32 %v227, %v594
        %v596 = vadd.f32 %v592, %v595
        %s597 = sld [smem:[#allocation2 + $0x503]]
        %v598 = vstv %s597
        %v599 = vmul.f32 %v229, %v598
        %v600 = vadd.f32 %v596, %v599
        %v601 = vmul.f32 %v600, 0.5
        %v602 = vmul.f32 %v600, 0.70710677
        %v603 = verf.f32.pop %v602
        %v604 = vadd.f32 %v603, 1.0
        %v605 = vmul.f32 %v601, %v604
        %s606 = sld [smem:[#allocation5 + $0xa]]
        %v607 = vstv %s606
        %v608 = vmul.f32 %v605, %v607
        %v609 = vadd.f32 %v573, %v608
        %s610 = sld [smem:[#allocation5 + $0x8a]]
        %v611 = vstv %s610
        %v612 = vmul.f32 %v605, %v611
        %v613 = vadd.f32 %v577, %v612
        %s614 = sld [smem:[#allocation5 + $0x10a]]
        %v615 = vstv %s614
        %v616 = vmul.f32 %v605, %v615
        %v617 = vadd.f32 %v581, %v616
        %s618 = sld [smem:[#allocation5 + $0x18a]]
        %v619 = vstv %s618
        %v620 = vmul.f32 %v605, %v619
        %v621 = vadd.f32 %v585, %v620
        %s622 = sld [smem:[#allocation2 + $0x580]]
        %v623 = vstv %s622
        %v624 = vmul.f32 %v223, %v623
        %s625 = sld [smem:[#allocation2 + $0x581]]
        %v626 = vstv %s625
        %v627 = vmul.f32 %v225, %v626
        %v628 = vadd.f32 %v624, %v627
        %s629 = sld [smem:[#allocation2 + $0x582]]
        %v630 = vstv %s629
        %v631 = vmul.f32 %v227, %v630
        %v632 = vadd.f32 %v628, %v631
        %s633 = sld [smem:[#allocation2 + $0x583]]
        %v634 = vstv %s633
        %v635 = vmul.f32 %v229, %v634
        %v636 = vadd.f32 %v632, %v635
        %v637 = vmul.f32 %v636, 0.5
        %v638 = vmul.f32 %v636, 0.70710677
        %v639 = verf.f32.pop %v638
        %v640 = vadd.f32 %v639, 1.0
        %v641 = vmul.f32 %v637, %v640
        %s642 = sld [smem:[#allocation5 + $0xb]]
        %v643 = vstv %s642
        %v644 = vmul.f32 %v641, %v643
        %v645 = vadd.f32 %v609, %v644
        %s646 = sld [smem:[#allocation5 + $0x8b]]
        %v647 = vstv %s646
        %v648 = vmul.f32 %v641, %v647
        %v649 = vadd.f32 %v613, %v648
        %s650 = sld [smem:[#allocation5 + $0x10b]]
        %v651 = vstv %s650
        %v652 = vmul.f32 %v641, %v651
        %v653 = vadd.f32 %v617, %v652
        %s654 = sld [smem:[#allocation5 + $0x18b]]
        %v655 = vstv %s654
        %v656 = vmul.f32 %v641, %v655
        %v657 = vadd.f32 %v621, %v656
        %s658 = sld [smem:[#allocation2 + $0x600]]
        %v659 = vstv %s658
        %v660 = vmul.f32 %v223, %v659
        %s661 = sld [smem:[#allocation2 + $0x601]]
        %v662 = vstv %s661
        %v663 = vmul.f32 %v225, %v662
        %v664 = vadd.f32 %v660, %v663
        %s665 = sld [smem:[#allocation2 + $0x602]]
        %v666 = vstv %s665
        %v667 = vmul.f32 %v227, %v666
        %v668 = vadd.f32 %v664, %v667
        %s669 = sld [smem:[#allocation2 + $0x603]]
        %v670 = vstv %s669
        %v671 = vmul.f32 %v229, %v670
        %v672 = vadd.f32 %v668, %v671
        %v673 = vmul.f32 %v672, 0.5
        %v674 = vmul.f32 %v672, 0.70710677
        %v675 = verf.f32.pop %v674
        %v676 = vadd.f32 %v675, 1.0
        %v677 = vmul.f32 %v673, %v676
        %s678 = sld [smem:[#allocation5 + $0xc]]
        %v679 = vstv %s678
        %v680 = vmul.f32 %v677, %v679
        %v681 = vadd.f32 %v645, %v680
        %s682 = sld [smem:[#allocation5 + $0x8c]]
        %v683 = vstv %s682
        %v684 = vmul.f32 %v677, %v683
        %v685 = vadd.f32 %v649, %v684
        %s686 = sld [smem:[#allocation5 + $0x10c]]
        %v687 = vstv %s686
        %v688 = vmul.f32 %v677, %v687
        %v689 = vadd.f32 %v653, %v688
        %s690 = sld [smem:[#allocation5 + $0x18c]]
        %v691 = vstv %s690
        %v692 = vmul.f32 %v677, %v691
        %v693 = vadd.f32 %v657, %v692
        %s694 = sld [smem:[#allocation2 + $0x680]]
        %v695 = vstv %s694
        %v696 = vmul.f32 %v223, %v695
        %s697 = sld [smem:[#allocation2 + $0x681]]
        %v698 = vstv %s697
        %v699 = vmul.f32 %v225, %v698
        %v700 = vadd.f32 %v696, %v699
        %s701 = sld [smem:[#allocation2 + $0x682]]
        %v702 = vstv %s701
        %v703 = vmul.f32 %v227, %v702
        %v704 = vadd.f32 %v700, %v703
        %s705 = sld [smem:[#allocation2 + $0x683]]
        %v706 = vstv %s705
        %v707 = vmul.f32 %v229, %v706
        %v708 = vadd.f32 %v704, %v707
        %v709 = vmul.f32 %v708, 0.5
        %v710 = vmul.f32 %v708, 0.70710677
        %v711 = verf.f32.pop %v710
        %v712 = vadd.f32 %v711, 1.0
        %v713 = vmul.f32 %v709, %v712
        %s714 = sld [smem:[#allocation5 + $0xd]]
        %v715 = vstv %s714
        %v716 = vmul.f32 %v713, %v715
        %v717 = vadd.f32 %v681, %v716
        %s718 = sld [smem:[#allocation5 + $0x8d]]
        %v719 = vstv %s718
        %v720 = vmul.f32 %v713, %v719
        %v721 = vadd.f32 %v685, %v720
        %s722 = sld [smem:[#allocation5 + $0x10d]]
        %v723 = vstv %s722
        %v724 = vmul.f32 %v713, %v723
        %v725 = vadd.f32 %v689, %v724
        %s726 = sld [smem:[#allocation5 + $0x18d]]
        %v727 = vstv %s726
        %v728 = vmul.f32 %v713, %v727
        %v729 = vadd.f32 %v693, %v728
        %s730 = sld [smem:[#allocation2 + $0x700]]
        %v731 = vstv %s730
        %v732 = vmul.f32 %v223, %v731
        %s733 = sld [smem:[#allocation2 + $0x701]]
        %v734 = vstv %s733
        %v735 = vmul.f32 %v225, %v734
        %v736 = vadd.f32 %v732, %v735
        %s737 = sld [smem:[#allocation2 + $0x702]]
        %v738 = vstv %s737
        %v739 = vmul.f32 %v227, %v738
        %v740 = vadd.f32 %v736, %v739
        %s741 = sld [smem:[#allocation2 + $0x703]]
        %v742 = vstv %s741
        %v743 = vmul.f32 %v229, %v742
        %v744 = vadd.f32 %v740, %v743
        %v745 = vmul.f32 %v744, 0.5
        %v746 = vmul.f32 %v744, 0.70710677
        %v747 = verf.f32.pop %v746
        %v748 = vadd.f32 %v747, 1.0
        %v749 = vmul.f32 %v745, %v748
        %s750 = sld [smem:[#allocation5 + $0xe]]
        %v751 = vstv %s750
        %v752 = vmul.f32 %v749, %v751
        %v753 = vadd.f32 %v717, %v752
        %s754 = sld [smem:[#allocation5 + $0x8e]]
        %v755 = vstv %s754
        %v756 = vmul.f32 %v749, %v755
        %v757 = vadd.f32 %v721, %v756
        %s758 = sld [smem:[#allocation5 + $0x10e]]
        %v759 = vstv %s758
        %v760 = vmul.f32 %v749, %v759
        %v761 = vadd.f32 %v725, %v760
        %s762 = sld [smem:[#allocation5 + $0x18e]]
        %v763 = vstv %s762
        %v764 = vmul.f32 %v749, %v763
        %v765 = vadd.f32 %v729, %v764
        %s766 = sld [smem:[#allocation2 + $0x780]]
        %v767 = vstv %s766
        %v768 = vmul.f32 %v223, %v767
        %s769 = sld [smem:[#allocation2 + $0x781]]
        %v770 = vstv %s769
        %v771 = vmul.f32 %v225, %v770
        %v772 = vadd.f32 %v768, %v771
        %s773 = sld [smem:[#allocation2 + $0x782]]
        %v774 = vstv %s773
        %v775 = vmul.f32 %v227, %v774
        %v776 = vadd.f32 %v772, %v775
        %s777 = sld [smem:[#allocation2 + $0x783]]
        %v778 = vstv %s777
        %v779 = vmul.f32 %v229, %v778
        %v780 = vadd.f32 %v776, %v779
        %v781 = vmul.f32 %v780, 0.5
        %v782 = vmul.f32 %v780, 0.70710677
        %v783 = verf.f32.pop %v782
        %v784 = vadd.f32 %v783, 1.0
        %v785 = vmul.f32 %v781, %v784
        %s786 = sld [smem:[#allocation5 + $0xf]]
        %v787 = vstv %s786
        %v788 = vmul.f32 %v785, %v787
        %v789 = vadd.f32 %v753, %v788
        %s790 = sld [smem:[#allocation5 + $0x8f]]
        %v791 = vstv %s790
        %v792 = vmul.f32 %v785, %v791
        %v793 = vadd.f32 %v757, %v792
        %s794 = sld [smem:[#allocation5 + $0x10f]]
        %v795 = vstv %s794
        %v796 = vmul.f32 %v785, %v795
        %v797 = vadd.f32 %v761, %v796
        %s798 = sld [smem:[#allocation5 + $0x18f]]
        %v799 = vstv %s798
        %v800 = vmul.f32 %v785, %v799
        %v801 = vadd.f32 %v765, %v800
        %v802 = vmul.f32 %v789, 0.5
        %v803 = vmul.f32 %v789, 0.70710677
        %v804 = verf.f32.pop %v803
        %v805 = vadd.f32 %v804, 1.0
        %v806 = vmul.f32 %v802, %v805
        %v807 = vadd.f32 %v806, %v223
        %808 = vst [vmem:[%s214] sm:$0x3] %v807
        %v809 = vmul.f32 %v793, 0.5
        %v810 = vmul.f32 %v793, 0.70710677
        %v811 = verf.f32.pop %v810
        %v812 = vadd.f32 %v811, 1.0
        %v813 = vmul.f32 %v809, %v812
        %v814 = vadd.f32 %v813, %v225
        %s815 = scalar_lea.vmem %s214, 2 [#allocation7]
        %816 = vst [vmem:[%s815] sm:$0x3] %v814
        %v817 = vmul.f32 %v797, 0.5
        %v818 = vmul.f32 %v797, 0.70710677
        %v819 = verf.f32.pop %v818
        %v820 = vadd.f32 %v819, 1.0
        %v821 = vmul.f32 %v817, %v820
        %v822 = vadd.f32 %v821, %v227
        %s823 = scalar_lea.vmem %s214, 4 [#allocation7]
        %824 = vst [vmem:[%s823] sm:$0x3] %v822
        %v825 = vmul.f32 %v801, 0.5
        %v826 = vmul.f32 %v801, 0.70710677
        %v827 = verf.f32.pop %v826
        %v828 = vadd.f32 %v827, 1.0
        %v829 = vmul.f32 %v825, %v828
        %v830 = vadd.f32 %v829, %v229
        %s831 = scalar_lea.vmem %s214, 6 [#allocation7]
        %832 = vst [vmem:[%s831] sm:$0x3] %v830
        %s833 = sand.u32 %s111, 1
        %s834 = scalar_lea.sflag [#allocation3], %s833
        %s835 = sand.u32 %s111, 1
        %s836 = smul.addr %s835, 8
        %s837 = scalar_lea.vmem [#allocation7], %s836
        // Predicated region
        $region41: #{tpu_custom_call.1} parent=31 // pred_check
          %p838 = pneg %p121
        $region42: #{tpu_custom_call.1} parent=31 // pred_check_branch
          %840 = sbr.rel (%p838) target = $region44
        $region43: #{tpu_custom_call.1} parent=31 // pred_region
          %s842 = ssub.s32 128, 128
          %843 = vsyncadd %s834, %s842
          %s844 = smul.addr %s23, 4
          %s845 = sadd.s32 %s24, %s844
          %s846 = smul.addr %s845, 32
          %s847 = scalar_lea.hbm %s3, %s846
          %s848 = sshll.u32 %s837, 4
          %s849 = int_to_ptr.vmem [resolvable:$true] %s848
          %854 = dma.vmem_to_hbm [thread:$0]  %s849, 128, %s847, %s834, 32, 32, 2
        $region44: #{tpu_custom_call.1} parent=31 // pred_fallthru
          _
      $region32: #{tpu_custom_call.1} parent=5 // pred_fallthru
        _
      %p855 = scmp.le.s32.totalorder 2, %s14
      // Predicated region
      $region45: #{tpu_custom_call.1} parent=5 // pred_check
        %p856 = pneg %p855
      $region46: #{tpu_custom_call.1} parent=5 // pred_check_branch
        %858 = sbr.rel (%p856) target = $region48
      $region47: #{tpu_custom_call.1} parent=5 // pred_region
        %s859 = ssub.s32 %s14, 2
        // Predicated region
        $region49: #{tpu_custom_call.1} parent=47 // pred_check
          %p860 = pneg %p127
        $region50: #{tpu_custom_call.1} parent=47 // pred_check_branch
          %862 = sbr.rel (%p860) target = $region52
        $region51: #{tpu_custom_call.1} parent=47 // pred_region
          %s863 = sand.u32 %s112, 1
          %s864 = scalar_lea.sflag [#allocation3], %s863
          %s865 = sand.u32 %s112, 1
          %s866 = smul.addr %s865, 8
          %s867 = scalar_lea.vmem [#allocation7], %s866
          %868 = dma.done %s864, 128
        $region52: #{tpu_custom_call.1} parent=47 // pred_fallthru
          _
      $region48: #{tpu_custom_call.1} parent=5 // pred_fallthru
        _
    $region6: #{tpu_custom_call.1} parent=1 // loop_footer
      %s18 = sadd.s32 1, %s14
    $region7: #{tpu_custom_call.1} parent=1 // loop_footer_branch
      %13 = sbr.rel target = $region3
    $region8: #{tpu_custom_call.1} parent=1 // loop_exit
      _
    %869 = vsyncpa [#allocation3], 1
    %s870 = scalar_lea.sflag [#allocation3], 1
    %871 = vsyncpa %s870, 1
    %872 = vsyncpa [#allocation4], 1
    %s873 = scalar_lea.sflag [#allocation4], 1
    %874 = vsyncpa %s873, 1
    %875 = vsyncpa [#allocation6], 1

</llo_original>
